<compile_context>
chip_gen: v7x
topology: tpu7x:2x2x1
jax: 0.10.0
libtpu: 0.0.40
codegen_flags: <defaults>
</compile_context>

<pallas_src>
import numpy as np
import jax
import jax.numpy as jnp
from jax.experimental import pallas as pl
from jax.experimental.pallas import tpu as pltpu

_SCALES = (1, 2, 3, 6)
_S2 = tuple(s * s for s in _SCALES)            # (1, 4, 9, 36)
_OFF = (0, 1, 5, 14)                           # tight column offsets
_TOT = sum(_S2)                                # 50


# --------------------------------------------------------------------------- #
# Pallas kernel
# --------------------------------------------------------------------------- #
def _pyramid_pooling_kernel(x_ref, p_ref, w_ref, scale_ref, shift_ref, u_ref,
                            o_ref):
    # x_ref     : (1, C, HWp)      one image, spatial flattened on the lane axis
    # p_ref     : (HWp, 50)        0/1 pool-membership, all four scales packed
    # w_ref     : (Cbr, C)         stacked 1x1-conv weights with BN scale folded
    # scale_ref : (Cbr, 50) f32    block-mask * (1 / pool_area)
    # shift_ref : (Cbr, 50) f32    block-mask * folded BN shift
    # u_ref     : (50, HWp)        0/1 nearest-upsample operator, all scales
    # o_ref     : (1, C + Cbr, HWp)
    C = x_ref.shape[1]

    x = x_ref[0]                                             # native dtype
    # Pass-through of the original feature map (output channels [0, C)).
    o_ref[0, :C, :] = x

    # 1) All-scale adaptive average pooling (as window sums): one MXU matmul.
    psum = jnp.dot(x, p_ref[...],
                   preferred_element_type=jnp.float32)        # (C, 50)
    # 2) All four 1x1 convs (BN scale folded into the weights): one MXU matmul.
    y = jnp.dot(w_ref[...].astype(jnp.float32), psum,
                preferred_element_type=jnp.float32)           # (Cbr, 50)
    # 3) Fused {1/area, BN shift, block mask} + ReLU on the VPU.
    #    Off-block columns have scale == shift == 0, so they relu to exactly 0
    #    and never contaminate the upsample matmul.
    y = jnp.maximum(y * scale_ref[...] + shift_ref[...], 0.0)  # (Cbr, 50)
    # 4) All-scale nearest-neighbour upsample: one lane-dense MXU matmul.
    feat = jnp.dot(y.astype(u_ref.dtype), u_ref[...],
                   preferred_element_type=jnp.float32)         # (Cbr, HWp)
    o_ref[0, C:, :] = feat.astype(o_ref.dtype)


# --------------------------------------------------------------------------- #
# Constant operator construction (trace time, tiny)
# --------------------------------------------------------------------------- #
def _pool_membership_and_area(H, W):
    """0/1 membership P (HW, 50) and per-column pool areas (50,)."""
    P = np.zeros((H * W, _TOT), np.float32)
    area = np.ones((_TOT,), np.float32)
    for k, s in enumerate(_SCALES):
        off = _OFF[k]
        for i in range(s):
            h0 = (i * H) // s
            h1 = -((-(i + 1) * H) // s)          # ceil, PyTorch boundaries
            for j in range(s):
                w0 = (j * W) // s
                w1 = -((-(j + 1) * W) // s)
                col = off + i * s + j
                area[col] = float((h1 - h0) * (w1 - w0))
                for h in range(h0, h1):
                    P[h * W + w0:h * W + w1, col] = 1.0
    return P, area


def _upsample_matrix(H, W):
    """0/1 nearest-upsample U (50, HW) for all four scales."""
    U = np.zeros((_TOT, H * W), np.float32)
    for k, s in enumerate(_SCALES):
        off = _OFF[k]
        hi = (np.arange(H) * s) // H             # PyTorch nearest: floor(dst*in/out)
        wi = (np.arange(W) * s) // W
        for y in range(H):
            for x in range(W):
                U[off + hi[y] * s + wi[x], y * W + x] = 1.0
    return U


# --------------------------------------------------------------------------- #
# Wrapper
# --------------------------------------------------------------------------- #
def pyramid_pooling_pallas(x_nchw, conv_weights, bn_gamma, bn_beta, bn_mean,
                           bn_var, eps=1e-5):
    """x_nchw: (N, C, H, W); conv_weights: 4x (Cout, C, 1, 1); bn_*: 4x (Cout,)."""
    N, C, H, W = x_nchw.shape
    Cout = int(np.asarray(conv_weights[0]).shape[0])
    Cbr = 4 * Cout
    HW = H * W
    HWp = -(-HW // 128) * 128                    # lane-dense spatial axis
    dtype = x_nchw.dtype
    itemsize = np.dtype(dtype).itemsize
    c_total = C + Cbr

    # --- packed constant operators (tight 50-column layout, no 36-pad) ------
    P_np, area = _pool_membership_and_area(H, W)
    U_np = _upsample_matrix(H, W)
    P_all = np.zeros((HWp, _TOT), np.float32)
    P_all[:HW, :] = P_np                         # padded spatial rows stay 0
    U_all = np.zeros((_TOT, HWp), np.float32)
    U_all[:, :HW] = U_np

    # Fold eval-mode BatchNorm into the bias-free 1x1 convs; build fused
    # block-masked scale/shift so the kernel needs a single FMA + ReLU.
    W_big = np.zeros((Cbr, C), np.float32)
    scale = np.zeros((Cbr, _TOT), np.float32)
    shift = np.zeros((Cbr, _TOT), np.float32)
    for k in range(4):
        g = np.asarray(bn_gamma[k], np.float32)
        v = np.asarray(bn_var[k], np.float32)
        m = np.asarray(bn_mean[k], np.float32)
        bt = np.asarray(bn_beta[k], np.float32)
        sc = g / np.sqrt(v + eps)
        W_big[k * Cout:(k + 1) * Cout, :] = (
            np.asarray(conv_weights[k], np.float32)[:, :, 0, 0] * sc[:, None])
        b_fold = bt - m * sc
        c0, c1 = _OFF[k], _OFF[k] + _S2[k]
        scale[k * Cout:(k + 1) * Cout, c0:c1] = 1.0 / area[c0:c1][None, :]
        shift[k * Cout:(k + 1) * Cout, c0:c1] = b_fold[:, None]

    # --- input layout: free reshape, zero-pad spatial to a multiple of 128 --
    x_flat = x_nchw.reshape(N, C, HW)
    if HWp != HW:
        x_flat = jnp.pad(x_flat, ((0, 0), (0, 0), (0, HWp - HW)))

    # --- VMEM budget derived from actual block sizes (cap 100 MiB) ----------
    lane = lambda n: -(-n // 128) * 128
    x_blk = C * HWp * itemsize
    o_blk = c_total * HWp * itemsize
    const_bytes = ((HWp * lane(_TOT) + _TOT * HWp + Cbr * lane(C)) * itemsize
                   + 2 * Cbr * lane(_TOT) * 4)
    tmp_bytes = (Cbr * HWp + (C + 2 * Cbr) * lane(_TOT)) * 4   # f32 temporaries
    vmem_need = 2 * (x_blk + o_blk) + const_bytes + tmp_bytes
    vmem_limit = int(min(100 * 2**20, max(32 * 2**20, int(1.5 * vmem_need))))

    flops = 2 * N * (C * HWp * _TOT + Cbr * C * _TOT + Cbr * _TOT * HWp)
    bytes_accessed = int(N * (2 * C + Cbr) * HWp * itemsize + const_bytes)
    cost = pl.CostEstimate(flops=flops, transcendentals=0,
                           bytes_accessed=bytes_accessed)

    def _const_spec(shape, single_buffer):
        kw = {"pipeline_mode": pl.Buffered(1)} if single_buffer else {}
        return pl.BlockSpec(shape, lambda n, _s=shape: (0,) * len(_s), **kw)

    def _build(single_buffer_consts):
        in_specs = [
            pl.BlockSpec((1, C, HWp), lambda n: (n, 0, 0)),
            _const_spec((HWp, _TOT), single_buffer_consts),
            _const_spec((Cbr, C), single_buffer_consts),
            _const_spec((Cbr, _TOT), single_buffer_consts),
            _const_spec((Cbr, _TOT), single_buffer_consts),
            _const_spec((_TOT, HWp), single_buffer_consts),
        ]
        out_specs = pl.BlockSpec((1, c_total, HWp), lambda n: (n, 0, 0))
        return pl.pallas_call(
            _pyramid_pooling_kernel,
            out_shape=jax.ShapeDtypeStruct((N, c_total, HWp), dtype),
            grid_spec=pltpu.PrefetchScalarGridSpec(
                num_scalar_prefetch=0,
                grid=(N,),
                in_specs=in_specs,
                out_specs=out_specs,
            ),
            compiler_params=pltpu.CompilerParams(
                dimension_semantics=("parallel",),
                vmem_limit_bytes=vmem_limit,
            ),
            cost_estimate=cost,
        )

    # MXU operands stay in the input's native dtype (bf16-native friendly);
    # P / U are exact 0/1 in any dtype, 1/area & BN shift stay f32.
    args = (x_flat,
            jnp.asarray(P_all, dtype),
            jnp.asarray(W_big, dtype),
            jnp.asarray(scale, jnp.float32),
            jnp.asarray(shift, jnp.float32),
            jnp.asarray(U_all, dtype))

    try:
        out_flat = jax.block_until_ready(_build(True)(*args))
    except Exception:
        # Fallback if this jax build rejects pipeline_mode=pl.Buffered(1).
        out_flat = jax.block_until_ready(_build(False)(*args))

    if HWp != HW:
        out_flat = out_flat[:, :, :HW]
    return out_flat.reshape(N, c_total, H, W)


# --------------------------------------------------------------------------- #
# Pure-numpy reference of the PyTorch forward (eval-mode BatchNorm2d)
# --------------------------------------------------------------------------- #
def _reference_forward(x, conv_w, gammas, betas, means, vars_, eps=1e-5):
    x = np.asarray(x, np.float64)
    N, C, H, W = x.shape
    feats = [x]
    for k, s in enumerate(_SCALES):
        pooled = np.zeros((N, C, s, s), np.float64)
        for i in range(s):
            h0 = (i * H) // s
            h1 = -((-(i + 1) * H) // s)
            for j in range(s):
                w0 = (j * W) // s
                w1 = -((-(j + 1) * W) // s)
                pooled[:, :, i, j] = x[:, :, h0:h1, w0:w1].mean(axis=(2, 3))
        wk = np.asarray(conv_w[k], np.float64)[:, :, 0, 0]
        z = np.einsum('oc,ncij->noij', wk, pooled)
        sc = np.asarray(gammas[k], np.float64) / np.sqrt(
            np.asarray(vars_[k], np.float64) + eps)
        z = ((z - np.asarray(means[k], np.float64)[None, :, None, None])
             * sc[None, :, None, None]
             + np.asarray(betas[k], np.float64)[None, :, None, None])
        z = np.maximum(z, 0.0)
        hi = (np.arange(H) * s) // H
        wi = (np.arange(W) * s) // W
        feats.append(z[:, :, hi[:, None], wi[None, :]])
    return np.concatenate(feats, axis=1)


if __name__ == "__main__":
    key = jax.random.PRNGKey(0)
    keys = jax.random.split(key, 21)

    N, C, H, W = 2, 8, 16, 16
    Cout = C // 4

    x = jax.random.normal(keys[0], (N, C, H, W), dtype=jnp.float32)

    conv_w, gammas, betas, means, vars_ = [], [], [], [], []
    for k in range(4):
        kw, kg, kb, km, kv = keys[1 + 5 * k: 6 + 5 * k]
        conv_w.append(np.asarray(
            jax.random.normal(kw, (Cout, C, 1, 1), dtype=jnp.float32)) / np.sqrt(C))
        gammas.append(np.asarray(
            1.0 + 0.1 * jax.random.normal(kg, (Cout,), dtype=jnp.float32)))
        betas.append(np.asarray(
            0.1 * jax.random.normal(kb, (Cout,), dtype=jnp.float32)))
        means.append(np.asarray(
            0.1 * jax.random.normal(km, (Cout,), dtype=jnp.float32)))
        vars_.append(np.asarray(
            0.5 + jax.random.uniform(kv, (Cout,), dtype=jnp.float32)))

    out = pyramid_pooling_pallas(x, conv_w, gammas, betas, means, vars_)
    out = jax.block_until_ready(out)

    ref = _reference_forward(np.asarray(x), conv_w, gammas, betas, means, vars_)

    assert out.shape == (N, C + 4 * Cout, H, W)
    assert np.allclose(np.asarray(out), ref, rtol=1e-4, atol=1e-4)

    print("KERNEL_OK")
</pallas_src>

<mosaic_0001>
module attributes {stable_mosaic.version = 11 : i64} {
  func.func @_pyramid_pooling_kernel(%arg0: i32, %arg1: memref<1x8x256xf32, #tpu.memory_space<vmem>>, %arg2: memref<256x50xf32, #tpu.memory_space<vmem>>, %arg3: memref<8x8xf32, #tpu.memory_space<vmem>>, %arg4: memref<8x50xf32, #tpu.memory_space<vmem>>, %arg5: memref<8x50xf32, #tpu.memory_space<vmem>>, %arg6: memref<50x256xf32, #tpu.memory_space<vmem>>, %arg7: memref<1x16x256xf32, #tpu.memory_space<vmem>>) attributes {dimension_semantics = [#tpu.dimension_semantics<parallel>], iteration_bounds = array<i64: 2>, scalar_prefetch = 0 : i64, scratch_operands = 0 : i64, tpu.core_type = #tpu.core_type<tc>, window_params = [{transform_indices = @transform_0, window_bounds = array<i64: 1, 8, 256>}, {pipeline_mode = #tpu.pipeline_mode<synchronous>, transform_indices = @transform_1, window_bounds = array<i64: 256, 50>}, {pipeline_mode = #tpu.pipeline_mode<synchronous>, transform_indices = @transform_2, window_bounds = array<i64: 8, 8>}, {pipeline_mode = #tpu.pipeline_mode<synchronous>, transform_indices = @transform_3, window_bounds = array<i64: 8, 50>}, {pipeline_mode = #tpu.pipeline_mode<synchronous>, transform_indices = @transform_4, window_bounds = array<i64: 8, 50>}, {pipeline_mode = #tpu.pipeline_mode<synchronous>, transform_indices = @transform_5, window_bounds = array<i64: 50, 256>}, {transform_indices = @transform_6, window_bounds = array<i64: 1, 16, 256>}]} {
    %c0 = arith.constant 0 : index
    %c0_0 = arith.constant 0 : index
    %c0_1 = arith.constant 0 : index
    %0 = vector.load %arg1[%c0, %c0_0, %c0_1] : memref<1x8x256xf32, #tpu.memory_space<vmem>>, vector<1x8x256xf32>
    %1 = vector.shape_cast %0 : vector<1x8x256xf32> to vector<8x256xf32>
    %c0_2 = arith.constant 0 : index
    %c0_3 = arith.constant 0 : index
    %c0_4 = arith.constant 0 : index
    %2 = vector.load %arg7[%c0_2, %c0_3, %c0_4] : memref<1x16x256xf32, #tpu.memory_space<vmem>>, vector<1x8x256xf32>
    %3 = vector.shape_cast %2 : vector<1x8x256xf32> to vector<8x256xf32>
    %4 = vector.shape_cast %1 : vector<8x256xf32> to vector<1x8x256xf32>
    tpu.vector_store %arg7[%c0_2, %c0_3, %c0_4], %4 {strides = array<i32>} : memref<1x16x256xf32, #tpu.memory_space<vmem>>, vector<1x8x256xf32>,
    %c0_5 = arith.constant 0 : index
    %c0_6 = arith.constant 0 : index
    %5 = vector.load %arg2[%c0_5, %c0_6] : memref<256x50xf32, #tpu.memory_space<vmem>>, vector<256x50xf32>
    %cst = arith.constant dense<0.000000e+00> : vector<8x50xf32>
    %6 = tpu.matmul %1, %5, %cst {dimension_numbers = #tpu.dot_dimension_numbers<[1], [0], [0], [1], [0, 0, 1, 1], [], []>} : vector<8x256xf32>, vector<256x50xf32>, vector<8x50xf32> -> vector<8x50xf32>
    %c0_7 = arith.constant 0 : index
    %c0_8 = arith.constant 0 : index
    %7 = vector.load %arg3[%c0_7, %c0_8] : memref<8x8xf32, #tpu.memory_space<vmem>>, vector<8x8xf32>
    %cst_9 = arith.constant dense<0.000000e+00> : vector<8x50xf32>
    %8 = tpu.matmul %7, %6, %cst_9 {dimension_numbers = #tpu.dot_dimension_numbers<[1], [0], [0], [1], [0, 0, 1, 1], [], []>} : vector<8x8xf32>, vector<8x50xf32>, vector<8x50xf32> -> vector<8x50xf32>
    %c0_10 = arith.constant 0 : index
    %c0_11 = arith.constant 0 : index
    %9 = vector.load %arg4[%c0_10, %c0_11] : memref<8x50xf32, #tpu.memory_space<vmem>>, vector<8x50xf32>
    %10 = arith.mulf %8, %9 : vector<8x50xf32>
    %c0_12 = arith.constant 0 : index
    %c0_13 = arith.constant 0 : index
    %11 = vector.load %arg5[%c0_12, %c0_13] : memref<8x50xf32, #tpu.memory_space<vmem>>, vector<8x50xf32>
    %12 = arith.addf %10, %11 : vector<8x50xf32>
    %cst_14 = arith.constant 0.000000e+00 : f32
    %13 = vector.broadcast %cst_14 : f32 to vector<8x50xf32>
    %14 = arith.maximumf %12, %13 : vector<8x50xf32>
    %c0_15 = arith.constant 0 : index
    %c0_16 = arith.constant 0 : index
    %15 = vector.load %arg6[%c0_15, %c0_16] : memref<50x256xf32, #tpu.memory_space<vmem>>, vector<50x256xf32>
    %cst_17 = arith.constant dense<0.000000e+00> : vector<8x256xf32>
    %16 = tpu.matmul %14, %15, %cst_17 {dimension_numbers = #tpu.dot_dimension_numbers<[1], [0], [0], [1], [0, 0, 1, 1], [], []>} : vector<8x50xf32>, vector<50x256xf32>, vector<8x256xf32> -> vector<8x256xf32>
    %c0_18 = arith.constant 0 : index
    %c8 = arith.constant 8 : index
    %c0_19 = arith.constant 0 : index
    %17 = vector.load %arg7[%c0_18, %c8, %c0_19] : memref<1x16x256xf32, #tpu.memory_space<vmem>>, vector<1x8x256xf32>
    %18 = vector.shape_cast %17 : vector<1x8x256xf32> to vector<8x256xf32>
    %19 = vector.shape_cast %16 : vector<8x256xf32> to vector<1x8x256xf32>
    tpu.vector_store %arg7[%c0_18, %c8, %c0_19], %19 {strides = array<i32>} : memref<1x16x256xf32, #tpu.memory_space<vmem>>, vector<1x8x256xf32>,
    return
  }
  func.func @transform_0(%arg0: i32) -> (i32, i32, i32) {
    %c0_i32 = arith.constant 0 : i32
    %c0_i32_0 = arith.constant 0 : i32
    %c0_i32_1 = arith.constant 0 : i32
    return %arg0, %c0_i32, %c0_i32_0 : i32, i32, i32
  }
  func.func @transform_1(%arg0: i32) -> (i32, i32) {
    %c0_i32 = arith.constant 0 : i32
    %c0_i32_0 = arith.constant 0 : i32
    %c0_i32_1 = arith.constant 0 : i32
    return %c0_i32, %c0_i32_0 : i32, i32
  }
  func.func @transform_2(%arg0: i32) -> (i32, i32) {
    %c0_i32 = arith.constant 0 : i32
    %c0_i32_0 = arith.constant 0 : i32
    %c0_i32_1 = arith.constant 0 : i32
    return %c0_i32, %c0_i32_0 : i32, i32
  }
  func.func @transform_3(%arg0: i32) -> (i32, i32) {
    %c0_i32 = arith.constant 0 : i32
    %c0_i32_0 = arith.constant 0 : i32
    %c0_i32_1 = arith.constant 0 : i32
    return %c0_i32, %c0_i32_0 : i32, i32
  }
  func.func @transform_4(%arg0: i32) -> (i32, i32) {
    %c0_i32 = arith.constant 0 : i32
    %c0_i32_0 = arith.constant 0 : i32
    %c0_i32_1 = arith.constant 0 : i32
    return %c0_i32, %c0_i32_0 : i32, i32
  }
  func.func @transform_5(%arg0: i32) -> (i32, i32) {
    %c0_i32 = arith.constant 0 : i32
    %c0_i32_0 = arith.constant 0 : i32
    %c0_i32_1 = arith.constant 0 : i32
    return %c0_i32, %c0_i32_0 : i32, i32
  }
  func.func @transform_6(%arg0: i32) -> (i32, i32, i32) {
    %c0_i32 = arith.constant 0 : i32
    %c0_i32_0 = arith.constant 0 : i32
    %c0_i32_1 = arith.constant 0 : i32
    return %arg0, %c0_i32, %c0_i32_0 : i32, i32, i32
  }
}

module attributes {stable_mosaic.version = 11 : i64} {
  func.func @_pyramid_pooling_kernel(%arg0: i32, %arg1: memref<1x8x256xf32, #tpu.memory_space<vmem>>, %arg2: memref<256x50xf32, #tpu.memory_space<vmem>>, %arg3: memref<8x8xf32, #tpu.memory_space<vmem>>, %arg4: memref<8x50xf32, #tpu.memory_space<vmem>>, %arg5: memref<8x50xf32, #tpu.memory_space<vmem>>, %arg6: memref<50x256xf32, #tpu.memory_space<vmem>>, %arg7: memref<1x16x256xf32, #tpu.memory_space<vmem>>) attributes {dimension_semantics = [#tpu.dimension_semantics<parallel>], iteration_bounds = array<i64: 2>, scalar_prefetch = 0 : i64, scratch_operands = 0 : i64, tpu.core_type = #tpu.core_type<tc>, window_params = [{transform_indices = @transform_0, window_bounds = array<i64: 1, 8, 256>}, {pipeline_mode = #tpu.pipeline_mode<synchronous>, transform_indices = @transform_1, window_bounds = array<i64: 256, 50>}, {pipeline_mode = #tpu.pipeline_mode<synchronous>, transform_indices = @transform_2, window_bounds = array<i64: 8, 8>}, {pipeline_mode = #tpu.pipeline_mode<synchronous>, transform_indices = @transform_3, window_bounds = array<i64: 8, 50>}, {pipeline_mode = #tpu.pipeline_mode<synchronous>, transform_indices = @transform_4, window_bounds = array<i64: 8, 50>}, {pipeline_mode = #tpu.pipeline_mode<synchronous>, transform_indices = @transform_5, window_bounds = array<i64: 50, 256>}, {transform_indices = @transform_6, window_bounds = array<i64: 1, 16, 256>}]} {
    %c0 = arith.constant 0 : index
    %c0_0 = arith.constant 0 : index
    %c0_1 = arith.constant 0 : index
    %0 = vector.load %arg1[%c0, %c0_0, %c0_1] : memref<1x8x256xf32, #tpu.memory_space<vmem>>, vector<1x8x256xf32>
    %1 = vector.shape_cast %0 : vector<1x8x256xf32> to vector<8x256xf32>
    %c0_2 = arith.constant 0 : index
    %c0_3 = arith.constant 0 : index
    %c0_4 = arith.constant 0 : index
    %2 = vector.load %arg7[%c0_2, %c0_3, %c0_4] : memref<1x16x256xf32, #tpu.memory_space<vmem>>, vector<1x8x256xf32>
    %3 = vector.shape_cast %2 : vector<1x8x256xf32> to vector<8x256xf32>
    %4 = vector.shape_cast %1 : vector<8x256xf32> to vector<1x8x256xf32>
    tpu.vector_store %arg7[%c0_2, %c0_3, %c0_4], %4 {strides = array<i32>} : memref<1x16x256xf32, #tpu.memory_space<vmem>>, vector<1x8x256xf32>,
    %c0_5 = arith.constant 0 : index
    %c0_6 = arith.constant 0 : index
    %5 = vector.load %arg2[%c0_5, %c0_6] : memref<256x50xf32, #tpu.memory_space<vmem>>, vector<256x50xf32>
    %cst = arith.constant dense<0.000000e+00> : vector<8x50xf32>
    %6 = tpu.matmul %1, %5, %cst {dimension_numbers = #tpu.dot_dimension_numbers<[1], [0], [0], [1], [0, 0, 1, 1], [], []>} : vector<8x256xf32>, vector<256x50xf32>, vector<8x50xf32> -> vector<8x50xf32>
    %c0_7 = arith.constant 0 : index
    %c0_8 = arith.constant 0 : index
    %7 = vector.load %arg3[%c0_7, %c0_8] : memref<8x8xf32, #tpu.memory_space<vmem>>, vector<8x8xf32>
    %cst_9 = arith.constant dense<0.000000e+00> : vector<8x50xf32>
    %8 = tpu.matmul %7, %6, %cst_9 {dimension_numbers = #tpu.dot_dimension_numbers<[1], [0], [0], [1], [0, 0, 1, 1], [], []>} : vector<8x8xf32>, vector<8x50xf32>, vector<8x50xf32> -> vector<8x50xf32>
    %c0_10 = arith.constant 0 : index
    %c0_11 = arith.constant 0 : index
    %9 = vector.load %arg4[%c0_10, %c0_11] : memref<8x50xf32, #tpu.memory_space<vmem>>, vector<8x50xf32>
    %10 = arith.mulf %8, %9 : vector<8x50xf32>
    %c0_12 = arith.constant 0 : index
    %c0_13 = arith.constant 0 : index
    %11 = vector.load %arg5[%c0_12, %c0_13] : memref<8x50xf32, #tpu.memory_space<vmem>>, vector<8x50xf32>
    %12 = arith.addf %10, %11 : vector<8x50xf32>
    %cst_14 = arith.constant 0.000000e+00 : f32
    %13 = vector.broadcast %cst_14 : f32 to vector<8x50xf32>
    %14 = arith.maximumf %12, %13 : vector<8x50xf32>
    %c0_15 = arith.constant 0 : index
    %c0_16 = arith.constant 0 : index
    %15 = vector.load %arg6[%c0_15, %c0_16] : memref<50x256xf32, #tpu.memory_space<vmem>>, vector<50x256xf32>
    %cst_17 = arith.constant dense<0.000000e+00> : vector<8x256xf32>
    %16 = tpu.matmul %14, %15, %cst_17 {dimension_numbers = #tpu.dot_dimension_numbers<[1], [0], [0], [1], [0, 0, 1, 1], [], []>} : vector<8x50xf32>, vector<50x256xf32>, vector<8x256xf32> -> vector<8x256xf32>
    %c0_18 = arith.constant 0 : index
    %c8 = arith.constant 8 : index
    %c0_19 = arith.constant 0 : index
    %17 = vector.load %arg7[%c0_18, %c8, %c0_19] : memref<1x16x256xf32, #tpu.memory_space<vmem>>, vector<1x8x256xf32>
    %18 = vector.shape_cast %17 : vector<1x8x256xf32> to vector<8x256xf32>
    %19 = vector.shape_cast %16 : vector<8x256xf32> to vector<1x8x256xf32>
    tpu.vector_store %arg7[%c0_18, %c8, %c0_19], %19 {strides = array<i32>} : memref<1x16x256xf32, #tpu.memory_space<vmem>>, vector<1x8x256xf32>,
    return
  }
  func.func @transform_0(%arg0: i32) -> (i32, i32, i32) {
    %c0_i32 = arith.constant 0 : i32
    %c0_i32_0 = arith.constant 0 : i32
    %c0_i32_1 = arith.constant 0 : i32
    return %arg0, %c0_i32, %c0_i32_0 : i32, i32, i32
  }
  func.func @transform_1(%arg0: i32) -> (i32, i32) {
    %c0_i32 = arith.constant 0 : i32
    %c0_i32_0 = arith.constant 0 : i32
    %c0_i32_1 = arith.constant 0 : i32
    return %c0_i32, %c0_i32_0 : i32, i32
  }
  func.func @transform_2(%arg0: i32) -> (i32, i32) {
    %c0_i32 = arith.constant 0 : i32
    %c0_i32_0 = arith.constant 0 : i32
    %c0_i32_1 = arith.constant 0 : i32
    return %c0_i32, %c0_i32_0 : i32, i32
  }
  func.func @transform_3(%arg0: i32) -> (i32, i32) {
    %c0_i32 = arith.constant 0 : i32
    %c0_i32_0 = arith.constant 0 : i32
    %c0_i32_1 = arith.constant 0 : i32
    return %c0_i32, %c0_i32_0 : i32, i32
  }
  func.func @transform_4(%arg0: i32) -> (i32, i32) {
    %c0_i32 = arith.constant 0 : i32
    %c0_i32_0 = arith.constant 0 : i32
    %c0_i32_1 = arith.constant 0 : i32
    return %c0_i32, %c0_i32_0 : i32, i32
  }
  func.func @transform_5(%arg0: i32) -> (i32, i32) {
    %c0_i32 = arith.constant 0 : i32
    %c0_i32_0 = arith.constant 0 : i32
    %c0_i32_1 = arith.constant 0 : i32
    return %c0_i32, %c0_i32_0 : i32, i32
  }
  func.func @transform_6(%arg0: i32) -> (i32, i32, i32) {
    %c0_i32 = arith.constant 0 : i32
    %c0_i32_0 = arith.constant 0 : i32
    %c0_i32_1 = arith.constant 0 : i32
    return %arg0, %c0_i32, %c0_i32_0 : i32, i32, i32
  }
}

</mosaic_0001>

<llo_original>
// kernel: tpu_custom_call.1
$region0: #{tpu_custom_call.1}
  #allocation0 [shape = 'u32[]', space=smem, size = 0x4, offset = 0x4, fixed_abs, tag = 'smem constant byte address 0x4 - core index']
  #allocation1 [shape = 'u32[144,128]{1,0:T(1,128)}', space=vmem, size = 0x12000, scoped, tag = 'internal scratch']
  %s0 = inlined_call_operand.vmem [shape: f32[2,8,256], index: 0, kind: input, shape index: {}]
  %s1 = inlined_call_operand.vmem [shape: f32[256,50], index: 1, kind: input, shape index: {}]
  %s2 = inlined_call_operand.vmem [shape: f32[8,8], index: 2, kind: input, shape index: {}]
  %s3 = inlined_call_operand.vmem [shape: f32[8,50], index: 3, kind: input, shape index: {}]
  %s4 = inlined_call_operand.vmem [shape: f32[8,50], index: 4, kind: input, shape index: {}]
  %s5 = inlined_call_operand.vmem [shape: f32[50,256], index: 5, kind: input, shape index: {}]
  %s6 = inlined_call_operand.hbm [shape: f32[2,16,256], index: 6, kind: output, shape index: {}]
  %s7 = sld [smem:[#allocation0]]
  $region57: #{tpu_custom_call.1} parent=0
    _
  %s9 = ssub.s32 1, %s7
  %s10 = scalar_select 0, %s9, %s7
  $region1: #{tpu_custom_call.1} parent=0
    #allocation2 [shape = 'u8[32768]{0}', space=vmem, size = 0x8000, scoped, tag = 'output window, operand 0']
    #allocation3 [shape = 's32[2]{0}', space=sflag, size = 0x8, scoped, tag = 'scoped memory for tpu_custom_call.1']
    %11 = vsyncpa [#allocation3], 0
    %s12 = scalar_lea.sflag [#allocation3], 1
    %13 = vsyncpa %s12, 0
    loop: start=0, step=1, limit=4
    $region2: #{tpu_custom_call.1} parent=1 // loop_pre_header
      _
    $region3: #{tpu_custom_call.1} parent=1 // loop_header
      %s15 = sphi 0, %s19
      %p16 = scmp.ge.s32.totalorder %s15, 4
      %s25 = sphi 0, %s27
      %s28 = sphi 0, %s25
      %s29 = sphi 0, %s28
      %s45 = sphi 0, %s29
      %s49 = sphi 0, %s49
      %s51 = sphi 0, %s49
      %s52 = sphi 0, %s51
      %s66 = sphi 0, %s52
      %s70 = sphi 0, %s70
      %s72 = sphi 0, %s70
      %s73 = sphi 0, %s72
      %s87 = sphi 0, %s73
      %s91 = sphi 0, %s91
      %s93 = sphi 0, %s91
      %s94 = sphi 0, %s93
      %s108 = sphi 0, %s94
      %s112 = sphi 0, %s112
      %s114 = sphi 0, %s112
      %s115 = sphi 0, %s114
      %s129 = sphi 0, %s115
      %s133 = sphi 0, %s133
      %s135 = sphi 0, %s133
      %s136 = sphi 0, %s135
      %s150 = sphi 0, %s136
      %s156 = sphi 0, %s158
      %s159 = sphi 0, %s156
      %s160 = sphi 0, %s159
      %s176 = sphi 0, %s160
    $region4: #{tpu_custom_call.1} parent=1 // loop_header_branch
      %18 = sbr.rel (%p16) target = $region8
    $region5: #{tpu_custom_call.1} parent=1 // loop_body
      %s20 = ssub.s32 %s15, 1
      %s21 = ssub.s32 %s15, 2
      %s22 = sadd.s32 %s15, 1
      %s23 = ssub.s32 %s15, %s22
      %p24 = scmp.eq.s32.totalorder %s23, 0
      %s26 = sadd.s32 %s25, 1
      %s27 = scalar_select %p24, %s25, %s26
      %p30 = pneg %p24
      %p31 = scmp.eq.s32.totalorder %s15, 1
      %p32 = por %p30, %p31
      %p33 = scmp.ne.s32.totalorder %s25, %s28
      %p34 = scmp.eq.s32.totalorder %s15, 0
      %p35 = por %p33, %p34
      %p36 = scmp.ne.s32.totalorder %s25, %s28
      %p37 = scmp.eq.s32.totalorder %s20, 1
      %p38 = por %p36, %p37
      %p39 = scmp.ne.s32.totalorder %s28, %s29
      %p40 = scmp.eq.s32.totalorder %s20, 0
      %p41 = por %p39, %p40
      %p42 = scmp.ne.s32.totalorder %s28, %s29
      %p43 = scmp.eq.s32.totalorder %s21, 1
      %p44 = por %p42, %p43
      %p46 = scmp.ne.s32.totalorder %s29, %s45
      %p47 = scmp.eq.s32.totalorder %s21, 0
      %p48 = por %p46, %p47
      %s50 = sadd.s32 %s49, 1
      %p53 = scmp.eq.s32.totalorder %s15, 1
      %p54 = scmp.ne.s32.totalorder %s49, %s51
      %p55 = scmp.eq.s32.totalorder %s15, 0
      %p56 = por %p54, %p55
      %p57 = scmp.ne.s32.totalorder %s49, %s51
      %p58 = scmp.eq.s32.totalorder %s20, 1
      %p59 = por %p57, %p58
      %p60 = scmp.ne.s32.totalorder %s51, %s52
      %p61 = scmp.eq.s32.totalorder %s20, 0
      %p62 = por %p60, %p61
      %p63 = scmp.ne.s32.totalorder %s51, %s52
      %p64 = scmp.eq.s32.totalorder %s21, 1
      %p65 = por %p63, %p64
      %p67 = scmp.ne.s32.totalorder %s52, %s66
      %p68 = scmp.eq.s32.totalorder %s21, 0
      %p69 = por %p67, %p68
      %s71 = sadd.s32 %s70, 1
      %p74 = scmp.eq.s32.totalorder %s15, 1
      %p75 = scmp.ne.s32.totalorder %s70, %s72
      %p76 = scmp.eq.s32.totalorder %s15, 0
      %p77 = por %p75, %p76
      %p78 = scmp.ne.s32.totalorder %s70, %s72
      %p79 = scmp.eq.s32.totalorder %s20, 1
      %p80 = por %p78, %p79
      %p81 = scmp.ne.s32.totalorder %s72, %s73
      %p82 = scmp.eq.s32.totalorder %s20, 0
      %p83 = por %p81, %p82
      %p84 = scmp.ne.s32.totalorder %s72, %s73
      %p85 = scmp.eq.s32.totalorder %s21, 1
      %p86 = por %p84, %p85
      %p88 = scmp.ne.s32.totalorder %s73, %s87
      %p89 = scmp.eq.s32.totalorder %s21, 0
      %p90 = por %p88, %p89
      %s92 = sadd.s32 %s91, 1
      %p95 = scmp.eq.s32.totalorder %s15, 1
      %p96 = scmp.ne.s32.totalorder %s91, %s93
      %p97 = scmp.eq.s32.totalorder %s15, 0
      %p98 = por %p96, %p97
      %p99 = scmp.ne.s32.totalorder %s91, %s93
      %p100 = scmp.eq.s32.totalorder %s20, 1
      %p101 = por %p99, %p100
      %p102 = scmp.ne.s32.totalorder %s93, %s94
      %p103 = scmp.eq.s32.totalorder %s20, 0
      %p104 = por %p102, %p103
      %p105 = scmp.ne.s32.totalorder %s93, %s94
      %p106 = scmp.eq.s32.totalorder %s21, 1
      %p107 = por %p105, %p106
      %p109 = scmp.ne.s32.totalorder %s94, %s108
      %p110 = scmp.eq.s32.totalorder %s21, 0
      %p111 = por %p109, %p110
      %s113 = sadd.s32 %s112, 1
      %p116 = scmp.eq.s32.totalorder %s15, 1
      %p117 = scmp.ne.s32.totalorder %s112, %s114
      %p118 = scmp.eq.s32.totalorder %s15, 0
      %p119 = por %p117, %p118
      %p120 = scmp.ne.s32.totalorder %s112, %s114
      %p121 = scmp.eq.s32.totalorder %s20, 1
      %p122 = por %p120, %p121
      %p123 = scmp.ne.s32.totalorder %s114, %s115
      %p124 = scmp.eq.s32.totalorder %s20, 0
      %p125 = por %p123, %p124
      %p126 = scmp.ne.s32.totalorder %s114, %s115
      %p127 = scmp.eq.s32.totalorder %s21, 1
      %p128 = por %p126, %p127
      %p130 = scmp.ne.s32.totalorder %s115, %s129
      %p131 = scmp.eq.s32.totalorder %s21, 0
      %p132 = por %p130, %p131
      %s134 = sadd.s32 %s133, 1
      %p137 = scmp.eq.s32.totalorder %s15, 1
      %p138 = scmp.ne.s32.totalorder %s133, %s135
      %p139 = scmp.eq.s32.totalorder %s15, 0
      %p140 = por %p138, %p139
      %p141 = scmp.ne.s32.totalorder %s133, %s135
      %p142 = scmp.eq.s32.totalorder %s20, 1
      %p143 = por %p141, %p142
      %p144 = scmp.ne.s32.totalorder %s135, %s136
      %p145 = scmp.eq.s32.totalorder %s20, 0
      %p146 = por %p144, %p145
      %p147 = scmp.ne.s32.totalorder %s135, %s136
      %p148 = scmp.eq.s32.totalorder %s21, 1
      %p149 = por %p147, %p148
      %p151 = scmp.ne.s32.totalorder %s136, %s150
      %p152 = scmp.eq.s32.totalorder %s21, 0
      %p153 = por %p151, %p152
      %s154 = ssub.s32 %s15, %s22
      %p155 = scmp.eq.s32.totalorder %s154, 0
      %s157 = sadd.s32 %s156, 1
      %s158 = scalar_select %p155, %s156, %s157
      %p161 = pneg %p155
      %p162 = scmp.eq.s32.totalorder %s15, 1
      %p163 = por %p161, %p162
      %p164 = scmp.ne.s32.totalorder %s156, %s159
      %p165 = scmp.eq.s32.totalorder %s15, 0
      %p166 = por %p164, %p165
      %p167 = scmp.ne.s32.totalorder %s156, %s159
      %p168 = scmp.eq.s32.totalorder %s20, 1
      %p169 = por %p167, %p168
      %p170 = scmp.ne.s32.totalorder %s159, %s160
      %p171 = scmp.eq.s32.totalorder %s20, 0
      %p172 = por %p170, %p171
      %p173 = scmp.ne.s32.totalorder %s159, %s160
      %p174 = scmp.eq.s32.totalorder %s21, 1
      %p175 = por %p173, %p174
      %p177 = scmp.ne.s32.totalorder %s160, %s176
      %p178 = scmp.eq.s32.totalorder %s21, 0
      %p179 = por %p177, %p178
      %p180 = scmp.le.s32.totalorder 1, %s15
      %p181 = scmp.lt.s32.totalorder %s15, 3
      %p182 = pnand %p180, %p181
      %p183 = pneg %p182
      // Predicated region
      $region9: #{tpu_custom_call.1} parent=5 // pred_check
        _
      $region10: #{tpu_custom_call.1} parent=5 // pred_check_branch
        %185 = sbr.rel (%p182) target = $region12
      $region11: #{tpu_custom_call.1} parent=5 // pred_region
        %s186 = ssub.s32 %s15, 1
        // Predicated region
        $region13: #{tpu_custom_call.1} parent=11 // pred_check
          %p187 = pneg %p62
        $region14: #{tpu_custom_call.1} parent=11 // pred_check_branch
          %189 = sbr.rel (%p187) target = $region16
        $region15: #{tpu_custom_call.1} parent=11 // pred_region
          _
        $region16: #{tpu_custom_call.1} parent=11 // pred_fallthru
          _
        // Predicated region
        $region17: #{tpu_custom_call.1} parent=11 // pred_check
          %p190 = pneg %p83
        $region18: #{tpu_custom_call.1} parent=11 // pred_check_branch
          %192 = sbr.rel (%p190) target = $region20
        $region19: #{tpu_custom_call.1} parent=11 // pred_region
          _
        $region20: #{tpu_custom_call.1} parent=11 // pred_fallthru
          _
        // Predicated region
        $region21: #{tpu_custom_call.1} parent=11 // pred_check
          %p193 = pneg %p104
        $region22: #{tpu_custom_call.1} parent=11 // pred_check_branch
          %195 = sbr.rel (%p193) target = $region24
        $region23: #{tpu_custom_call.1} parent=11 // pred_region
          _
        $region24: #{tpu_custom_call.1} parent=11 // pred_fallthru
          _
        // Predicated region
        $region25: #{tpu_custom_call.1} parent=11 // pred_check
          %p196 = pneg %p125
        $region26: #{tpu_custom_call.1} parent=11 // pred_check_branch
          %198 = sbr.rel (%p196) target = $region28
        $region27: #{tpu_custom_call.1} parent=11 // pred_region
          _
        $region28: #{tpu_custom_call.1} parent=11 // pred_fallthru
          _
        // Predicated region
        $region29: #{tpu_custom_call.1} parent=11 // pred_check
          %p199 = pneg %p146
        $region30: #{tpu_custom_call.1} parent=11 // pred_check_branch
          %201 = sbr.rel (%p199) target = $region32
        $region31: #{tpu_custom_call.1} parent=11 // pred_region
          _
        $region32: #{tpu_custom_call.1} parent=11 // pred_fallthru
          _
      $region12: #{tpu_custom_call.1} parent=5 // pred_fallthru
        _
      %p202 = scmp.lt.s32.totalorder %s15, 2
      // Predicated region
      $region33: #{tpu_custom_call.1} parent=5 // pred_check
        %p203 = pneg %p202
      $region34: #{tpu_custom_call.1} parent=5 // pred_check_branch
        %205 = sbr.rel (%p203) target = $region36
      $region35: #{tpu_custom_call.1} parent=5 // pred_region
        // Predicated region
        $region37: #{tpu_custom_call.1} parent=35 // pred_check
          %p206 = pneg %p35
        $region38: #{tpu_custom_call.1} parent=35 // pred_check_branch
          %208 = sbr.rel (%p206) target = $region40
        $region39: #{tpu_custom_call.1} parent=35 // pred_region
          %p209 = scmp.lt.s32.totalorder %s15, 1
          %s210 = scalar_select %p209, %s15, 1
          %s211 = smul.addr %s210, 2
          %s212 = smul.addr %s211, 8
          %s213 = scalar_lea.vmem %s0, %s212
        $region40: #{tpu_custom_call.1} parent=35 // pred_fallthru
          _
      $region36: #{tpu_custom_call.1} parent=5 // pred_fallthru
        _
      %p214 = scmp.le.s32.totalorder 1, %s15
      %p215 = scmp.lt.s32.totalorder %s15, 3
      %p216 = pnand %p214, %p215
      %p217 = pneg %p216
      // Predicated region
      $region41: #{tpu_custom_call.1} parent=5 // pred_check
        _
      $region42: #{tpu_custom_call.1} parent=5 // pred_check_branch
        %219 = sbr.rel (%p216) target = $region44
      $region43: #{tpu_custom_call.1} parent=5 // pred_region
        %s220 = ssub.s32 %s15, 1
        %p221 = scmp.lt.s32.totalorder %s20, 1
        %s222 = scalar_select %p221, %s20, 1
        %s223 = smul.addr %s222, 2
        %s224 = smul.addr %s223, 8
        %s225 = scalar_lea.vmem %s0, %s224
        %p226 = pneg %p41
        %p227 = pneg %p38
        %p228 = pneg %p62
        %p229 = pneg %p59
        %p230 = pneg %p83
        %p231 = pneg %p80
        %p232 = pneg %p104
        %p233 = pneg %p101
        %p234 = pneg %p125
        %p235 = pneg %p122
        %p236 = pneg %p146
        %p237 = pneg %p143
        %p238 = pneg %p172
        %p239 = pneg %p169
        %s240 = sand.u32 %s159, 1
        %s241 = scalar_lea.sflag [#allocation3], %s240
        %s242 = sand.u32 %s159, 1
        %s243 = smul.addr %s242, 32
        %s244 = scalar_lea.vmem [#allocation2], %s243
        %p245 = scmp.lt.s32.totalorder %s20, 1
        %s246 = scalar_select %p245, %s20, 1
        %s247 = smul.addr %s246, 2
        %s248 = smul.addr %s247, 8
        %s249 = scalar_lea.vmem %s0, %s248
        %v250 = vld [vmem:[%s249] sm:$0xff]
        %v251 = vld [vmem:[%s249 + $0x8] sm:$0xff]
        %252 = vst [vmem:[%s244] sm:$0xff] %v250
        %253 = vst [vmem:[%s244 + $0x8] sm:$0xff] %v251
        %v254 = vld [vmem:[%s1] sm:$0xff]
        %v255 = vld [vmem:[%s1 + $0x8] sm:$0xff]
        %v256 = vld [vmem:[%s1 + $0x10] sm:$0xff]
        %v257 = vld [vmem:[%s1 + $0x18] sm:$0xff]
        %v258 = vld [vmem:[%s1 + $0x20] sm:$0xff]
        %v259 = vld [vmem:[%s1 + $0x28] sm:$0xff]
        %v260 = vld [vmem:[%s1 + $0x30] sm:$0xff]
        %v261 = vld [vmem:[%s1 + $0x38] sm:$0xff]
        %v262 = vld [vmem:[%s1 + $0x40] sm:$0xff]
        %v263 = vld [vmem:[%s1 + $0x48] sm:$0xff]
        %v264 = vld [vmem:[%s1 + $0x50] sm:$0xff]
        %v265 = vld [vmem:[%s1 + $0x58] sm:$0xff]
        %v266 = vld [vmem:[%s1 + $0x60] sm:$0xff]
        %v267 = vld [vmem:[%s1 + $0x68] sm:$0xff]
        %v268 = vld [vmem:[%s1 + $0x70] sm:$0xff]
        %v269 = vld [vmem:[%s1 + $0x78] sm:$0xff]
        %v270 = vld [vmem:[%s1 + $0x80] sm:$0xff]
        %v271 = vld [vmem:[%s1 + $0x88] sm:$0xff]
        %v272 = vld [vmem:[%s1 + $0x90] sm:$0xff]
        %v273 = vld [vmem:[%s1 + $0x98] sm:$0xff]
        %v274 = vld [vmem:[%s1 + $0xa0] sm:$0xff]
        %v275 = vld [vmem:[%s1 + $0xa8] sm:$0xff]
        %v276 = vld [vmem:[%s1 + $0xb0] sm:$0xff]
        %v277 = vld [vmem:[%s1 + $0xb8] sm:$0xff]
        %v278 = vld [vmem:[%s1 + $0xc0] sm:$0xff]
        %v279 = vld [vmem:[%s1 + $0xc8] sm:$0xff]
        %v280 = vld [vmem:[%s1 + $0xd0] sm:$0xff]
        %v281 = vld [vmem:[%s1 + $0xd8] sm:$0xff]
        %v282 = vld [vmem:[%s1 + $0xe0] sm:$0xff]
        %v283 = vld [vmem:[%s1 + $0xe8] sm:$0xff]
        %v284 = vld [vmem:[%s1 + $0xf0] sm:$0xff]
        %v285 = vld [vmem:[%s1 + $0xf8] sm:$0xff]
        %286 = vmatprep.subr.mxu0 0.0
        %287 = vmatpush1.msra.mxu0 %v254
        %288 = vmatprep.subr.mxu0 0.0
        %289 = vmatpush1.msra.mxu0 %v255
        %290 = vmatprep.subr.mxu0 0.0
        %291 = vmatpush1.msra.mxu0 %v256
        %292 = vmatprep.subr.mxu0 0.0
        %293 = vmatpush1.msra.mxu0 %v257
        %294 = vmatprep.subr.mxu0 0.0
        %295 = vmatpush1.msra.mxu0 %v258
        %296 = vmatprep.subr.mxu0 0.0
        %297 = vmatpush1.msra.mxu0 %v259
        %298 = vmatprep.subr.mxu0 0.0
        %299 = vmatpush1.msra.mxu0 %v260
        %300 = vmatprep.subr.mxu0 0.0
        %301 = vmatpush1.msra.mxu0 %v261
        %302 = vmatprep.subr.mxu0 0.0
        %303 = vmatpush1.msra.mxu0 %v262
        %304 = vmatprep.subr.mxu0 0.0
        %305 = vmatpush1.msra.mxu0 %v263
        %306 = vmatprep.subr.mxu0 0.0
        %307 = vmatpush1.msra.mxu0 %v264
        %308 = vmatprep.subr.mxu0 0.0
        %309 = vmatpush1.msra.mxu0 %v265
        %310 = vmatprep.subr.mxu0 0.0
        %311 = vmatpush1.msra.mxu0 %v266
        %312 = vmatprep.subr.mxu0 0.0
        %313 = vmatpush1.msra.mxu0 %v267
        %314 = vmatprep.subr.mxu0 0.0
        %315 = vmatpush1.msra.mxu0 %v268
        %316 = vmatprep.subr.mxu0 0.0
        %317 = vmatpush1.msra.mxu0 %v269
        %318 = vmatprep.subr.mxu0 0.0
        %319 = vmatpush1.msra.mxu0 %v270
        %320 = vmatprep.subr.mxu0 0.0
        %321 = vmatpush1.msra.mxu0 %v271
        %322 = vmatprep.subr.mxu0 0.0
        %323 = vmatpush1.msra.mxu0 %v272
        %324 = vmatprep.subr.mxu0 0.0
        %325 = vmatpush1.msra.mxu0 %v273
        %326 = vmatprep.subr.mxu0 0.0
        %327 = vmatpush1.msra.mxu0 %v274
        %328 = vmatprep.subr.mxu0 0.0
        %329 = vmatpush1.msra.mxu0 %v275
        %330 = vmatprep.subr.mxu0 0.0
        %331 = vmatpush1.msra.mxu0 %v276
        %332 = vmatprep.subr.mxu0 0.0
        %333 = vmatpush1.msra.mxu0 %v277
        %334 = vmatprep.subr.mxu0 0.0
        %335 = vmatpush1.msra.mxu0 %v278
        %336 = vmatprep.subr.mxu0 0.0
        %337 = vmatpush1.msra.mxu0 %v279
        %338 = vmatprep.subr.mxu0 0.0
        %339 = vmatpush1.msra.mxu0 %v280
        %340 = vmatprep.subr.mxu0 0.0
        %341 = vmatpush1.msra.mxu0 %v281
        %342 = vmatprep.subr.mxu0 0.0
        %343 = vmatpush1.msra.mxu0 %v282
        %344 = vmatprep.subr.mxu0 0.0
        %345 = vmatpush1.msra.mxu0 %v283
        %346 = vmatprep.subr.mxu0 0.0
        %347 = vmatpush1.msra.mxu0 %v284
        %348 = vmatprep.subr.mxu0 0.0
        %349 = vmatpush1.msra.mxu0 %v285
        %350 = vmatprep.mubr.f32.mxu0 %v251
        %351 = vmatmul.mubr.f32.gmra.mrb[0].mxu0 %v250
        %v352 = vpop.f32.mrb[0].mxu0
        %v353 = vadd.f32 0.0, %v352
        %v354 = vpop.f32.mrb[0].mxu0
        %355 = vdwg.mxu0
        %v356 = vld [vmem:[%s2] sm:$0xff]
        %vm357 = vcmask 64512
        %v359 = vsel %vm357, %v356, 0
        %361 = vmatprep.subr.mxu0 0.0
        %362 = vmatpush1.msra.mxu0 %v353
        %363 = vmatprep.subr.mxu0 0.0
        %364 = vmatpush1.msra.mxu0 0.0
        %365 = vmatprep.subr.mxu0 0.0
        %366 = vmatpush1.msra.mxu0 0.0
        %367 = vmatprep.subr.mxu0 0.0
        %368 = vmatpush1.msra.mxu0 0.0
        %369 = vmatprep.subr.mxu0 0.0
        %370 = vmatpush1.msra.mxu0 0.0
        %371 = vmatprep.subr.mxu0 0.0
        %372 = vmatpush1.msra.mxu0 0.0
        %373 = vmatprep.subr.mxu0 0.0
        %374 = vmatpush1.msra.mxu0 0.0
        %375 = vmatprep.subr.mxu0 0.0
        %376 = vmatpush1.msra.mxu0 0.0
        %377 = vmatprep.subr.mxu0 0.0
        %378 = vmatpush1.msra.mxu0 0.0
        %379 = vmatprep.subr.mxu0 0.0
        %380 = vmatpush1.msra.mxu0 0.0
        %381 = vmatprep.subr.mxu0 0.0
        %382 = vmatpush1.msra.mxu0 0.0
        %383 = vmatprep.subr.mxu0 0.0
        %384 = vmatpush1.msra.mxu0 0.0
        %385 = vmatprep.subr.mxu0 0.0
        %386 = vmatpush1.msra.mxu0 0.0
        %387 = vmatprep.subr.mxu0 0.0
        %388 = vmatpush1.msra.mxu0 0.0
        %389 = vmatprep.subr.mxu0 0.0
        %390 = vmatpush1.msra.mxu0 0.0
        %391 = vmatprep.subr.mxu0 0.0
        %392 = vmatpush1.msra.mxu0 0.0
        %393 = vmatprep.subr.mxu0 0.0
        %394 = vmatpush1.msra.mxu0 0.0
        %395 = vmatprep.subr.mxu0 0.0
        %396 = vmatpush1.msra.mxu0 0.0
        %397 = vmatprep.subr.mxu0 0.0
        %398 = vmatpush1.msra.mxu0 0.0
        %399 = vmatprep.subr.mxu0 0.0
        %400 = vmatpush1.msra.mxu0 0.0
        %401 = vmatprep.subr.mxu0 0.0
        %402 = vmatpush1.msra.mxu0 0.0
        %403 = vmatprep.subr.mxu0 0.0
        %404 = vmatpush1.msra.mxu0 0.0
        %405 = vmatprep.subr.mxu0 0.0
        %406 = vmatpush1.msra.mxu0 0.0
        %407 = vmatprep.subr.mxu0 0.0
        %408 = vmatpush1.msra.mxu0 0.0
        %409 = vmatprep.subr.mxu0 0.0
        %410 = vmatpush1.msra.mxu0 0.0
        %411 = vmatprep.subr.mxu0 0.0
        %412 = vmatpush1.msra.mxu0 0.0
        %413 = vmatprep.subr.mxu0 0.0
        %414 = vmatpush1.msra.mxu0 0.0
        %415 = vmatprep.subr.mxu0 0.0
        %416 = vmatpush1.msra.mxu0 0.0
        %417 = vmatprep.subr.mxu0 0.0
        %418 = vmatpush1.msra.mxu0 0.0
        %419 = vmatprep.subr.mxu0 0.0
        %420 = vmatpush1.msra.mxu0 0.0
        %421 = vmatprep.subr.mxu0 0.0
        %422 = vmatpush1.msra.mxu0 0.0
        %423 = vmatprep.subr.mxu0 0.0
        %424 = vmatpush1.msra.mxu0 0.0
        %425 = vmatprep.mubr.f32.mxu0 0.0
        %426 = vmatmul.mubr.f32.gmra.mrb[0].mxu0 %v359
        %v427 = vpop.f32.mrb[0].mxu0
        %v428 = vadd.f32 0.0, %v427
        %v429 = vpop.f32.mrb[0].mxu0
        %430 = vdwg.mxu0
        %v431 = vld [vmem:[%s3] sm:$0xff]
        %v432 = vmul.f32 %v428, %v431
        %v433 = vld [vmem:[%s4] sm:$0xff]
        %v434 = vadd.f32 %v432, %v433
        %v435 = vmax.f32 %v434, 0.0
        %v436 = vld [vmem:[%s5] sm:$0xff]
        %v437 = vld [vmem:[%s5 + $0x8] sm:$0xff]
        %v438 = vld [vmem:[%s5 + $0x10] sm:$0xff]
        %v439 = vld [vmem:[%s5 + $0x18] sm:$0xff]
        %v440 = vld [vmem:[%s5 + $0x20] sm:$0xff]
        %v441 = vld [vmem:[%s5 + $0x28] sm:$0xff]
        %v442 = vld [vmem:[%s5 + $0x30] sm:$0xff]
        %v443 = vld [vmem:[%s5 + $0x38] sm:$0xff]
        %v444 = vld [vmem:[%s5 + $0x40] sm:$0xff]
        %v445 = vld [vmem:[%s5 + $0x48] sm:$0xff]
        %v446 = vld [vmem:[%s5 + $0x50] sm:$0xff]
        %v447 = vld [vmem:[%s5 + $0x58] sm:$0xff]
        %v448 = vld [vmem:[%s5 + $0x60] sm:$0x3]
        %v449 = vld [vmem:[%s5 + $0x68] sm:$0x3]
        %vm450 = vcmask 408576
        %v452 = vsel %vm450, %v435, 0
        %vm454 = vcmask 1041408
        %v456 = vsel %vm454, %v448, 0
        %v459 = vsel %vm454, %v449, 0
        %461 = vmatprep.subr.mxu0 %v437
        %462 = vmatpush1.msra.mxu0 %v436
        %463 = vmatprep.subr.mxu0 %v439
        %464 = vmatpush1.msra.mxu0 %v438
        %465 = vmatprep.subr.mxu0 %v441
        %466 = vmatpush1.msra.mxu0 %v440
        %467 = vmatprep.subr.mxu0 %v443
        %468 = vmatpush1.msra.mxu0 %v442
        %469 = vmatprep.subr.mxu0 %v445
        %470 = vmatpush1.msra.mxu0 %v444
        %471 = vmatprep.subr.mxu0 %v447
        %472 = vmatpush1.msra.mxu0 %v446
        %473 = vmatprep.subr.mxu0 %v459
        %474 = vmatpush1.msra.mxu0 %v456
        %475 = vmatprep.subr.mxu0 0.0
        %476 = vmatpush1.msra.mxu0 0.0
        %477 = vmatprep.subr.mxu0 0.0
        %478 = vmatpush1.msra.mxu0 0.0
        %479 = vmatprep.subr.mxu0 0.0
        %480 = vmatpush1.msra.mxu0 0.0
        %481 = vmatprep.subr.mxu0 0.0
        %482 = vmatpush1.msra.mxu0 0.0
        %483 = vmatprep.subr.mxu0 0.0
        %484 = vmatpush1.msra.mxu0 0.0
        %485 = vmatprep.subr.mxu0 0.0
        %486 = vmatpush1.msra.mxu0 0.0
        %487 = vmatprep.subr.mxu0 0.0
        %488 = vmatpush1.msra.mxu0 0.0
        %489 = vmatprep.subr.mxu0 0.0
        %490 = vmatpush1.msra.mxu0 0.0
        %491 = vmatprep.subr.mxu0 0.0
        %492 = vmatpush1.msra.mxu0 0.0
        %493 = vmatprep.subr.mxu0 0.0
        %494 = vmatpush1.msra.mxu0 0.0
        %495 = vmatprep.subr.mxu0 0.0
        %496 = vmatpush1.msra.mxu0 0.0
        %497 = vmatprep.subr.mxu0 0.0
        %498 = vmatpush1.msra.mxu0 0.0
        %499 = vmatprep.subr.mxu0 0.0
        %500 = vmatpush1.msra.mxu0 0.0
        %501 = vmatprep.subr.mxu0 0.0
        %502 = vmatpush1.msra.mxu0 0.0
        %503 = vmatprep.subr.mxu0 0.0
        %504 = vmatpush1.msra.mxu0 0.0
        %505 = vmatprep.subr.mxu0 0.0
        %506 = vmatpush1.msra.mxu0 0.0
        %507 = vmatprep.subr.mxu0 0.0
        %508 = vmatpush1.msra.mxu0 0.0
        %509 = vmatprep.subr.mxu0 0.0
        %510 = vmatpush1.msra.mxu0 0.0
        %511 = vmatprep.subr.mxu0 0.0
        %512 = vmatpush1.msra.mxu0 0.0
        %513 = vmatprep.subr.mxu0 0.0
        %514 = vmatpush1.msra.mxu0 0.0
        %515 = vmatprep.subr.mxu0 0.0
        %516 = vmatpush1.msra.mxu0 0.0
        %517 = vmatprep.subr.mxu0 0.0
        %518 = vmatpush1.msra.mxu0 0.0
        %519 = vmatprep.subr.mxu0 0.0
        %520 = vmatpush1.msra.mxu0 0.0
        %521 = vmatprep.subr.mxu0 0.0
        %522 = vmatpush1.msra.mxu0 0.0
        %523 = vmatprep.subr.mxu0 0.0
        %524 = vmatpush1.msra.mxu0 0.0
        %525 = vmatprep.mubr.f32.mxu0 0.0
        %526 = vmatmul.mubr.f32.gmra.mrb[0].mxu0 %v452
        %v527 = vpop.f32.mrb[0].mxu0
        %v528 = vadd.f32 0.0, %v527
        %v529 = vpop.f32.mrb[0].mxu0
        %v530 = vadd.f32 0.0, %v529
        %531 = vdwg.mxu0
        %532 = vst [vmem:[%s244 + $0x10] sm:$0xff] %v528
        %533 = vst [vmem:[%s244 + $0x18] sm:$0xff] %v530
        %s534 = sand.u32 %s159, 1
        %s535 = scalar_lea.sflag [#allocation3], %s534
        %s536 = sand.u32 %s159, 1
        %s537 = smul.addr %s536, 32
        %s538 = scalar_lea.vmem [#allocation2], %s537
        // Predicated region
        $region45: #{tpu_custom_call.1} parent=43 // pred_check
          %p539 = pneg %p169
        $region46: #{tpu_custom_call.1} parent=43 // pred_check_branch
          %541 = sbr.rel (%p539) target = $region48
        $region47: #{tpu_custom_call.1} parent=43 // pred_region
          %s543 = ssub.s32 512, 512
          %544 = vsyncadd %s535, %s543
          %s545 = smul.addr %s20, 4
          %s546 = smul.addr %s545, 128
          %s547 = scalar_lea.hbm %s6, %s546
          %s548 = sshll.u32 %s538, 4
          %s549 = int_to_ptr.vmem [resolvable:$true] %s548
          %554 = dma.vmem_to_hbm [thread:$0]  %s549, 512, %s547, %s535, 256, 256, 16
        $region48: #{tpu_custom_call.1} parent=43 // pred_fallthru
          _
      $region44: #{tpu_custom_call.1} parent=5 // pred_fallthru
        _
      %p555 = scmp.le.s32.totalorder 2, %s15
      // Predicated region
      $region49: #{tpu_custom_call.1} parent=5 // pred_check
        %p556 = pneg %p555
      $region50: #{tpu_custom_call.1} parent=5 // pred_check_branch
        %558 = sbr.rel (%p556) target = $region52
      $region51: #{tpu_custom_call.1} parent=5 // pred_region
        %s559 = ssub.s32 %s15, 2
        // Predicated region
        $region53: #{tpu_custom_call.1} parent=51 // pred_check
          %p560 = pneg %p175
        $region54: #{tpu_custom_call.1} parent=51 // pred_check_branch
          %562 = sbr.rel (%p560) target = $region56
        $region55: #{tpu_custom_call.1} parent=51 // pred_region
          %s563 = sand.u32 %s160, 1
          %s564 = scalar_lea.sflag [#allocation3], %s563
          %s565 = sand.u32 %s160, 1
          %s566 = smul.addr %s565, 32
          %s567 = scalar_lea.vmem [#allocation2], %s566
          %568 = dma.done %s564, 512
        $region56: #{tpu_custom_call.1} parent=51 // pred_fallthru
          _
      $region52: #{tpu_custom_call.1} parent=5 // pred_fallthru
        _
    $region6: #{tpu_custom_call.1} parent=1 // loop_footer
      %s19 = sadd.s32 1, %s15
    $region7: #{tpu_custom_call.1} parent=1 // loop_footer_branch
      %14 = sbr.rel target = $region3
    $region8: #{tpu_custom_call.1} parent=1 // loop_exit
      _
    %569 = vsyncpa [#allocation3], 1
    %s570 = scalar_lea.sflag [#allocation3], 1
    %571 = vsyncpa %s570, 1

// kernel: tpu_custom_call.1
$region0: #{tpu_custom_call.1}
  #allocation0 [shape = 'u32[]', space=smem, size = 0x4, offset = 0x4, fixed_abs, tag = 'smem constant byte address 0x4 - core index']
  #allocation1 [shape = 'u32[144,128]{1,0:T(1,128)}', space=vmem, size = 0x12000, scoped, tag = 'internal scratch']
  %s0 = inlined_call_operand.vmem [shape: f32[2,8,256], index: 0, kind: input, shape index: {}]
  %s1 = inlined_call_operand.vmem [shape: f32[256,50], index: 1, kind: input, shape index: {}]
  %s2 = inlined_call_operand.vmem [shape: f32[8,8], index: 2, kind: input, shape index: {}]
  %s3 = inlined_call_operand.vmem [shape: f32[8,50], index: 3, kind: input, shape index: {}]
  %s4 = inlined_call_operand.vmem [shape: f32[8,50], index: 4, kind: input, shape index: {}]
  %s5 = inlined_call_operand.vmem [shape: f32[50,256], index: 5, kind: input, shape index: {}]
  %s6 = inlined_call_operand.hbm [shape: f32[2,16,256], index: 6, kind: output, shape index: {}]
  %s7 = sld [smem:[#allocation0]]
  $region57: #{tpu_custom_call.1} parent=0
    _
  %s9 = ssub.s32 1, %s7
  %s10 = scalar_select 0, %s9, %s7
  $region1: #{tpu_custom_call.1} parent=0
    #allocation2 [shape = 'u8[32768]{0}', space=vmem, size = 0x8000, scoped, tag = 'output window, operand 0']
    #allocation3 [shape = 's32[2]{0}', space=sflag, size = 0x8, scoped, tag = 'scoped memory for tpu_custom_call.1']
    %11 = vsyncpa [#allocation3], 0
    %s12 = scalar_lea.sflag [#allocation3], 1
    %13 = vsyncpa %s12, 0
    loop: start=0, step=1, limit=4
    $region2: #{tpu_custom_call.1} parent=1 // loop_pre_header
      _
    $region3: #{tpu_custom_call.1} parent=1 // loop_header
      %s15 = sphi 0, %s19
      %p16 = scmp.ge.s32.totalorder %s15, 4
      %s25 = sphi 0, %s27
      %s28 = sphi 0, %s25
      %s29 = sphi 0, %s28
      %s45 = sphi 0, %s29
      %s49 = sphi 0, %s49
      %s51 = sphi 0, %s49
      %s52 = sphi 0, %s51
      %s66 = sphi 0, %s52
      %s70 = sphi 0, %s70
      %s72 = sphi 0, %s70
      %s73 = sphi 0, %s72
      %s87 = sphi 0, %s73
      %s91 = sphi 0, %s91
      %s93 = sphi 0, %s91
      %s94 = sphi 0, %s93
      %s108 = sphi 0, %s94
      %s112 = sphi 0, %s112
      %s114 = sphi 0, %s112
      %s115 = sphi 0, %s114
      %s129 = sphi 0, %s115
      %s133 = sphi 0, %s133
      %s135 = sphi 0, %s133
      %s136 = sphi 0, %s135
      %s150 = sphi 0, %s136
      %s156 = sphi 0, %s158
      %s159 = sphi 0, %s156
      %s160 = sphi 0, %s159
      %s176 = sphi 0, %s160
    $region4: #{tpu_custom_call.1} parent=1 // loop_header_branch
      %18 = sbr.rel (%p16) target = $region8
    $region5: #{tpu_custom_call.1} parent=1 // loop_body
      %s20 = ssub.s32 %s15, 1
      %s21 = ssub.s32 %s15, 2
      %s22 = sadd.s32 %s15, 1
      %s23 = ssub.s32 %s15, %s22
      %p24 = scmp.eq.s32.totalorder %s23, 0
      %s26 = sadd.s32 %s25, 1
      %s27 = scalar_select %p24, %s25, %s26
      %p30 = pneg %p24
      %p31 = scmp.eq.s32.totalorder %s15, 1
      %p32 = por %p30, %p31
      %p33 = scmp.ne.s32.totalorder %s25, %s28
      %p34 = scmp.eq.s32.totalorder %s15, 0
      %p35 = por %p33, %p34
      %p36 = scmp.ne.s32.totalorder %s25, %s28
      %p37 = scmp.eq.s32.totalorder %s20, 1
      %p38 = por %p36, %p37
      %p39 = scmp.ne.s32.totalorder %s28, %s29
      %p40 = scmp.eq.s32.totalorder %s20, 0
      %p41 = por %p39, %p40
      %p42 = scmp.ne.s32.totalorder %s28, %s29
      %p43 = scmp.eq.s32.totalorder %s21, 1
      %p44 = por %p42, %p43
      %p46 = scmp.ne.s32.totalorder %s29, %s45
      %p47 = scmp.eq.s32.totalorder %s21, 0
      %p48 = por %p46, %p47
      %s50 = sadd.s32 %s49, 1
      %p53 = scmp.eq.s32.totalorder %s15, 1
      %p54 = scmp.ne.s32.totalorder %s49, %s51
      %p55 = scmp.eq.s32.totalorder %s15, 0
      %p56 = por %p54, %p55
      %p57 = scmp.ne.s32.totalorder %s49, %s51
      %p58 = scmp.eq.s32.totalorder %s20, 1
      %p59 = por %p57, %p58
      %p60 = scmp.ne.s32.totalorder %s51, %s52
      %p61 = scmp.eq.s32.totalorder %s20, 0
      %p62 = por %p60, %p61
      %p63 = scmp.ne.s32.totalorder %s51, %s52
      %p64 = scmp.eq.s32.totalorder %s21, 1
      %p65 = por %p63, %p64
      %p67 = scmp.ne.s32.totalorder %s52, %s66
      %p68 = scmp.eq.s32.totalorder %s21, 0
      %p69 = por %p67, %p68
      %s71 = sadd.s32 %s70, 1
      %p74 = scmp.eq.s32.totalorder %s15, 1
      %p75 = scmp.ne.s32.totalorder %s70, %s72
      %p76 = scmp.eq.s32.totalorder %s15, 0
      %p77 = por %p75, %p76
      %p78 = scmp.ne.s32.totalorder %s70, %s72
      %p79 = scmp.eq.s32.totalorder %s20, 1
      %p80 = por %p78, %p79
      %p81 = scmp.ne.s32.totalorder %s72, %s73
      %p82 = scmp.eq.s32.totalorder %s20, 0
      %p83 = por %p81, %p82
      %p84 = scmp.ne.s32.totalorder %s72, %s73
      %p85 = scmp.eq.s32.totalorder %s21, 1
      %p86 = por %p84, %p85
      %p88 = scmp.ne.s32.totalorder %s73, %s87
      %p89 = scmp.eq.s32.totalorder %s21, 0
      %p90 = por %p88, %p89
      %s92 = sadd.s32 %s91, 1
      %p95 = scmp.eq.s32.totalorder %s15, 1
      %p96 = scmp.ne.s32.totalorder %s91, %s93
      %p97 = scmp.eq.s32.totalorder %s15, 0
      %p98 = por %p96, %p97
      %p99 = scmp.ne.s32.totalorder %s91, %s93
      %p100 = scmp.eq.s32.totalorder %s20, 1
      %p101 = por %p99, %p100
      %p102 = scmp.ne.s32.totalorder %s93, %s94
      %p103 = scmp.eq.s32.totalorder %s20, 0
      %p104 = por %p102, %p103
      %p105 = scmp.ne.s32.totalorder %s93, %s94
      %p106 = scmp.eq.s32.totalorder %s21, 1
      %p107 = por %p105, %p106
      %p109 = scmp.ne.s32.totalorder %s94, %s108
      %p110 = scmp.eq.s32.totalorder %s21, 0
      %p111 = por %p109, %p110
      %s113 = sadd.s32 %s112, 1
      %p116 = scmp.eq.s32.totalorder %s15, 1
      %p117 = scmp.ne.s32.totalorder %s112, %s114
      %p118 = scmp.eq.s32.totalorder %s15, 0
      %p119 = por %p117, %p118
      %p120 = scmp.ne.s32.totalorder %s112, %s114
      %p121 = scmp.eq.s32.totalorder %s20, 1
      %p122 = por %p120, %p121
      %p123 = scmp.ne.s32.totalorder %s114, %s115
      %p124 = scmp.eq.s32.totalorder %s20, 0
      %p125 = por %p123, %p124
      %p126 = scmp.ne.s32.totalorder %s114, %s115
      %p127 = scmp.eq.s32.totalorder %s21, 1
      %p128 = por %p126, %p127
      %p130 = scmp.ne.s32.totalorder %s115, %s129
      %p131 = scmp.eq.s32.totalorder %s21, 0
      %p132 = por %p130, %p131
      %s134 = sadd.s32 %s133, 1
      %p137 = scmp.eq.s32.totalorder %s15, 1
      %p138 = scmp.ne.s32.totalorder %s133, %s135
      %p139 = scmp.eq.s32.totalorder %s15, 0
      %p140 = por %p138, %p139
      %p141 = scmp.ne.s32.totalorder %s133, %s135
      %p142 = scmp.eq.s32.totalorder %s20, 1
      %p143 = por %p141, %p142
      %p144 = scmp.ne.s32.totalorder %s135, %s136
      %p145 = scmp.eq.s32.totalorder %s20, 0
      %p146 = por %p144, %p145
      %p147 = scmp.ne.s32.totalorder %s135, %s136
      %p148 = scmp.eq.s32.totalorder %s21, 1
      %p149 = por %p147, %p148
      %p151 = scmp.ne.s32.totalorder %s136, %s150
      %p152 = scmp.eq.s32.totalorder %s21, 0
      %p153 = por %p151, %p152
      %s154 = ssub.s32 %s15, %s22
      %p155 = scmp.eq.s32.totalorder %s154, 0
      %s157 = sadd.s32 %s156, 1
      %s158 = scalar_select %p155, %s156, %s157
      %p161 = pneg %p155
      %p162 = scmp.eq.s32.totalorder %s15, 1
      %p163 = por %p161, %p162
      %p164 = scmp.ne.s32.totalorder %s156, %s159
      %p165 = scmp.eq.s32.totalorder %s15, 0
      %p166 = por %p164, %p165
      %p167 = scmp.ne.s32.totalorder %s156, %s159
      %p168 = scmp.eq.s32.totalorder %s20, 1
      %p169 = por %p167, %p168
      %p170 = scmp.ne.s32.totalorder %s159, %s160
      %p171 = scmp.eq.s32.totalorder %s20, 0
      %p172 = por %p170, %p171
      %p173 = scmp.ne.s32.totalorder %s159, %s160
      %p174 = scmp.eq.s32.totalorder %s21, 1
      %p175 = por %p173, %p174
      %p177 = scmp.ne.s32.totalorder %s160, %s176
      %p178 = scmp.eq.s32.totalorder %s21, 0
      %p179 = por %p177, %p178
      %p180 = scmp.le.s32.totalorder 1, %s15
      %p181 = scmp.lt.s32.totalorder %s15, 3
      %p182 = pnand %p180, %p181
      %p183 = pneg %p182
      // Predicated region
      $region9: #{tpu_custom_call.1} parent=5 // pred_check
        _
      $region10: #{tpu_custom_call.1} parent=5 // pred_check_branch
        %185 = sbr.rel (%p182) target = $region12
      $region11: #{tpu_custom_call.1} parent=5 // pred_region
        %s186 = ssub.s32 %s15, 1
        // Predicated region
        $region13: #{tpu_custom_call.1} parent=11 // pred_check
          %p187 = pneg %p62
        $region14: #{tpu_custom_call.1} parent=11 // pred_check_branch
          %189 = sbr.rel (%p187) target = $region16
        $region15: #{tpu_custom_call.1} parent=11 // pred_region
          _
        $region16: #{tpu_custom_call.1} parent=11 // pred_fallthru
          _
        // Predicated region
        $region17: #{tpu_custom_call.1} parent=11 // pred_check
          %p190 = pneg %p83
        $region18: #{tpu_custom_call.1} parent=11 // pred_check_branch
          %192 = sbr.rel (%p190) target = $region20
        $region19: #{tpu_custom_call.1} parent=11 // pred_region
          _
        $region20: #{tpu_custom_call.1} parent=11 // pred_fallthru
          _
        // Predicated region
        $region21: #{tpu_custom_call.1} parent=11 // pred_check
          %p193 = pneg %p104
        $region22: #{tpu_custom_call.1} parent=11 // pred_check_branch
          %195 = sbr.rel (%p193) target = $region24
        $region23: #{tpu_custom_call.1} parent=11 // pred_region
          _
        $region24: #{tpu_custom_call.1} parent=11 // pred_fallthru
          _
        // Predicated region
        $region25: #{tpu_custom_call.1} parent=11 // pred_check
          %p196 = pneg %p125
        $region26: #{tpu_custom_call.1} parent=11 // pred_check_branch
          %198 = sbr.rel (%p196) target = $region28
        $region27: #{tpu_custom_call.1} parent=11 // pred_region
          _
        $region28: #{tpu_custom_call.1} parent=11 // pred_fallthru
          _
        // Predicated region
        $region29: #{tpu_custom_call.1} parent=11 // pred_check
          %p199 = pneg %p146
        $region30: #{tpu_custom_call.1} parent=11 // pred_check_branch
          %201 = sbr.rel (%p199) target = $region32
        $region31: #{tpu_custom_call.1} parent=11 // pred_region
          _
        $region32: #{tpu_custom_call.1} parent=11 // pred_fallthru
          _
      $region12: #{tpu_custom_call.1} parent=5 // pred_fallthru
        _
      %p202 = scmp.lt.s32.totalorder %s15, 2
      // Predicated region
      $region33: #{tpu_custom_call.1} parent=5 // pred_check
        %p203 = pneg %p202
      $region34: #{tpu_custom_call.1} parent=5 // pred_check_branch
        %205 = sbr.rel (%p203) target = $region36
      $region35: #{tpu_custom_call.1} parent=5 // pred_region
        // Predicated region
        $region37: #{tpu_custom_call.1} parent=35 // pred_check
          %p206 = pneg %p35
        $region38: #{tpu_custom_call.1} parent=35 // pred_check_branch
          %208 = sbr.rel (%p206) target = $region40
        $region39: #{tpu_custom_call.1} parent=35 // pred_region
          %p209 = scmp.lt.s32.totalorder %s15, 1
          %s210 = scalar_select %p209, %s15, 1
          %s211 = smul.addr %s210, 2
          %s212 = smul.addr %s211, 8
          %s213 = scalar_lea.vmem %s0, %s212
        $region40: #{tpu_custom_call.1} parent=35 // pred_fallthru
          _
      $region36: #{tpu_custom_call.1} parent=5 // pred_fallthru
        _
      %p214 = scmp.le.s32.totalorder 1, %s15
      %p215 = scmp.lt.s32.totalorder %s15, 3
      %p216 = pnand %p214, %p215
      %p217 = pneg %p216
      // Predicated region
      $region41: #{tpu_custom_call.1} parent=5 // pred_check
        _
      $region42: #{tpu_custom_call.1} parent=5 // pred_check_branch
        %219 = sbr.rel (%p216) target = $region44
      $region43: #{tpu_custom_call.1} parent=5 // pred_region
        %s220 = ssub.s32 %s15, 1
        %p221 = scmp.lt.s32.totalorder %s20, 1
        %s222 = scalar_select %p221, %s20, 1
        %s223 = smul.addr %s222, 2
        %s224 = smul.addr %s223, 8
        %s225 = scalar_lea.vmem %s0, %s224
        %p226 = pneg %p41
        %p227 = pneg %p38
        %p228 = pneg %p62
        %p229 = pneg %p59
        %p230 = pneg %p83
        %p231 = pneg %p80
        %p232 = pneg %p104
        %p233 = pneg %p101
        %p234 = pneg %p125
        %p235 = pneg %p122
        %p236 = pneg %p146
        %p237 = pneg %p143
        %p238 = pneg %p172
        %p239 = pneg %p169
        %s240 = sand.u32 %s159, 1
        %s241 = scalar_lea.sflag [#allocation3], %s240
        %s242 = sand.u32 %s159, 1
        %s243 = smul.addr %s242, 32
        %s244 = scalar_lea.vmem [#allocation2], %s243
        %p245 = scmp.lt.s32.totalorder %s20, 1
        %s246 = scalar_select %p245, %s20, 1
        %s247 = smul.addr %s246, 2
        %s248 = smul.addr %s247, 8
        %s249 = scalar_lea.vmem %s0, %s248
        %v250 = vld [vmem:[%s249] sm:$0xff]
        %v251 = vld [vmem:[%s249 + $0x8] sm:$0xff]
        %252 = vst [vmem:[%s244] sm:$0xff] %v250
        %253 = vst [vmem:[%s244 + $0x8] sm:$0xff] %v251
        %v254 = vld [vmem:[%s1] sm:$0xff]
        %v255 = vld [vmem:[%s1 + $0x8] sm:$0xff]
        %v256 = vld [vmem:[%s1 + $0x10] sm:$0xff]
        %v257 = vld [vmem:[%s1 + $0x18] sm:$0xff]
        %v258 = vld [vmem:[%s1 + $0x20] sm:$0xff]
        %v259 = vld [vmem:[%s1 + $0x28] sm:$0xff]
        %v260 = vld [vmem:[%s1 + $0x30] sm:$0xff]
        %v261 = vld [vmem:[%s1 + $0x38] sm:$0xff]
        %v262 = vld [vmem:[%s1 + $0x40] sm:$0xff]
        %v263 = vld [vmem:[%s1 + $0x48] sm:$0xff]
        %v264 = vld [vmem:[%s1 + $0x50] sm:$0xff]
        %v265 = vld [vmem:[%s1 + $0x58] sm:$0xff]
        %v266 = vld [vmem:[%s1 + $0x60] sm:$0xff]
        %v267 = vld [vmem:[%s1 + $0x68] sm:$0xff]
        %v268 = vld [vmem:[%s1 + $0x70] sm:$0xff]
        %v269 = vld [vmem:[%s1 + $0x78] sm:$0xff]
        %v270 = vld [vmem:[%s1 + $0x80] sm:$0xff]
        %v271 = vld [vmem:[%s1 + $0x88] sm:$0xff]
        %v272 = vld [vmem:[%s1 + $0x90] sm:$0xff]
        %v273 = vld [vmem:[%s1 + $0x98] sm:$0xff]
        %v274 = vld [vmem:[%s1 + $0xa0] sm:$0xff]
        %v275 = vld [vmem:[%s1 + $0xa8] sm:$0xff]
        %v276 = vld [vmem:[%s1 + $0xb0] sm:$0xff]
        %v277 = vld [vmem:[%s1 + $0xb8] sm:$0xff]
        %v278 = vld [vmem:[%s1 + $0xc0] sm:$0xff]
        %v279 = vld [vmem:[%s1 + $0xc8] sm:$0xff]
        %v280 = vld [vmem:[%s1 + $0xd0] sm:$0xff]
        %v281 = vld [vmem:[%s1 + $0xd8] sm:$0xff]
        %v282 = vld [vmem:[%s1 + $0xe0] sm:$0xff]
        %v283 = vld [vmem:[%s1 + $0xe8] sm:$0xff]
        %v284 = vld [vmem:[%s1 + $0xf0] sm:$0xff]
        %v285 = vld [vmem:[%s1 + $0xf8] sm:$0xff]
        %286 = vmatprep.subr.mxu0 0.0
        %287 = vmatpush1.msra.mxu0 %v254
        %288 = vmatprep.subr.mxu0 0.0
        %289 = vmatpush1.msra.mxu0 %v255
        %290 = vmatprep.subr.mxu0 0.0
        %291 = vmatpush1.msra.mxu0 %v256
        %292 = vmatprep.subr.mxu0 0.0
        %293 = vmatpush1.msra.mxu0 %v257
        %294 = vmatprep.subr.mxu0 0.0
        %295 = vmatpush1.msra.mxu0 %v258
        %296 = vmatprep.subr.mxu0 0.0
        %297 = vmatpush1.msra.mxu0 %v259
        %298 = vmatprep.subr.mxu0 0.0
        %299 = vmatpush1.msra.mxu0 %v260
        %300 = vmatprep.subr.mxu0 0.0
        %301 = vmatpush1.msra.mxu0 %v261
        %302 = vmatprep.subr.mxu0 0.0
        %303 = vmatpush1.msra.mxu0 %v262
        %304 = vmatprep.subr.mxu0 0.0
        %305 = vmatpush1.msra.mxu0 %v263
        %306 = vmatprep.subr.mxu0 0.0
        %307 = vmatpush1.msra.mxu0 %v264
        %308 = vmatprep.subr.mxu0 0.0
        %309 = vmatpush1.msra.mxu0 %v265
        %310 = vmatprep.subr.mxu0 0.0
        %311 = vmatpush1.msra.mxu0 %v266
        %312 = vmatprep.subr.mxu0 0.0
        %313 = vmatpush1.msra.mxu0 %v267
        %314 = vmatprep.subr.mxu0 0.0
        %315 = vmatpush1.msra.mxu0 %v268
        %316 = vmatprep.subr.mxu0 0.0
        %317 = vmatpush1.msra.mxu0 %v269
        %318 = vmatprep.subr.mxu0 0.0
        %319 = vmatpush1.msra.mxu0 %v270
        %320 = vmatprep.subr.mxu0 0.0
        %321 = vmatpush1.msra.mxu0 %v271
        %322 = vmatprep.subr.mxu0 0.0
        %323 = vmatpush1.msra.mxu0 %v272
        %324 = vmatprep.subr.mxu0 0.0
        %325 = vmatpush1.msra.mxu0 %v273
        %326 = vmatprep.subr.mxu0 0.0
        %327 = vmatpush1.msra.mxu0 %v274
        %328 = vmatprep.subr.mxu0 0.0
        %329 = vmatpush1.msra.mxu0 %v275
        %330 = vmatprep.subr.mxu0 0.0
        %331 = vmatpush1.msra.mxu0 %v276
        %332 = vmatprep.subr.mxu0 0.0
        %333 = vmatpush1.msra.mxu0 %v277
        %334 = vmatprep.subr.mxu0 0.0
        %335 = vmatpush1.msra.mxu0 %v278
        %336 = vmatprep.subr.mxu0 0.0
        %337 = vmatpush1.msra.mxu0 %v279
        %338 = vmatprep.subr.mxu0 0.0
        %339 = vmatpush1.msra.mxu0 %v280
        %340 = vmatprep.subr.mxu0 0.0
        %341 = vmatpush1.msra.mxu0 %v281
        %342 = vmatprep.subr.mxu0 0.0
        %343 = vmatpush1.msra.mxu0 %v282
        %344 = vmatprep.subr.mxu0 0.0
        %345 = vmatpush1.msra.mxu0 %v283
        %346 = vmatprep.subr.mxu0 0.0
        %347 = vmatpush1.msra.mxu0 %v284
        %348 = vmatprep.subr.mxu0 0.0
        %349 = vmatpush1.msra.mxu0 %v285
        %350 = vmatprep.mubr.f32.mxu0 %v251
        %351 = vmatmul.mubr.f32.gmra.mrb[0].mxu0 %v250
        %v352 = vpop.f32.mrb[0].mxu0
        %v353 = vadd.f32 0.0, %v352
        %v354 = vpop.f32.mrb[0].mxu0
        %355 = vdwg.mxu0
        %v356 = vld [vmem:[%s2] sm:$0xff]
        %vm357 = vcmask 64512
        %v359 = vsel %vm357, %v356, 0
        %361 = vmatprep.subr.mxu0 0.0
        %362 = vmatpush1.msra.mxu0 %v353
        %363 = vmatprep.subr.mxu0 0.0
        %364 = vmatpush1.msra.mxu0 0.0
        %365 = vmatprep.subr.mxu0 0.0
        %366 = vmatpush1.msra.mxu0 0.0
        %367 = vmatprep.subr.mxu0 0.0
        %368 = vmatpush1.msra.mxu0 0.0
        %369 = vmatprep.subr.mxu0 0.0
        %370 = vmatpush1.msra.mxu0 0.0
        %371 = vmatprep.subr.mxu0 0.0
        %372 = vmatpush1.msra.mxu0 0.0
        %373 = vmatprep.subr.mxu0 0.0
        %374 = vmatpush1.msra.mxu0 0.0
        %375 = vmatprep.subr.mxu0 0.0
        %376 = vmatpush1.msra.mxu0 0.0
        %377 = vmatprep.subr.mxu0 0.0
        %378 = vmatpush1.msra.mxu0 0.0
        %379 = vmatprep.subr.mxu0 0.0
        %380 = vmatpush1.msra.mxu0 0.0
        %381 = vmatprep.subr.mxu0 0.0
        %382 = vmatpush1.msra.mxu0 0.0
        %383 = vmatprep.subr.mxu0 0.0
        %384 = vmatpush1.msra.mxu0 0.0
        %385 = vmatprep.subr.mxu0 0.0
        %386 = vmatpush1.msra.mxu0 0.0
        %387 = vmatprep.subr.mxu0 0.0
        %388 = vmatpush1.msra.mxu0 0.0
        %389 = vmatprep.subr.mxu0 0.0
        %390 = vmatpush1.msra.mxu0 0.0
        %391 = vmatprep.subr.mxu0 0.0
        %392 = vmatpush1.msra.mxu0 0.0
        %393 = vmatprep.subr.mxu0 0.0
        %394 = vmatpush1.msra.mxu0 0.0
        %395 = vmatprep.subr.mxu0 0.0
        %396 = vmatpush1.msra.mxu0 0.0
        %397 = vmatprep.subr.mxu0 0.0
        %398 = vmatpush1.msra.mxu0 0.0
        %399 = vmatprep.subr.mxu0 0.0
        %400 = vmatpush1.msra.mxu0 0.0
        %401 = vmatprep.subr.mxu0 0.0
        %402 = vmatpush1.msra.mxu0 0.0
        %403 = vmatprep.subr.mxu0 0.0
        %404 = vmatpush1.msra.mxu0 0.0
        %405 = vmatprep.subr.mxu0 0.0
        %406 = vmatpush1.msra.mxu0 0.0
        %407 = vmatprep.subr.mxu0 0.0
        %408 = vmatpush1.msra.mxu0 0.0
        %409 = vmatprep.subr.mxu0 0.0
        %410 = vmatpush1.msra.mxu0 0.0
        %411 = vmatprep.subr.mxu0 0.0
        %412 = vmatpush1.msra.mxu0 0.0
        %413 = vmatprep.subr.mxu0 0.0
        %414 = vmatpush1.msra.mxu0 0.0
        %415 = vmatprep.subr.mxu0 0.0
        %416 = vmatpush1.msra.mxu0 0.0
        %417 = vmatprep.subr.mxu0 0.0
        %418 = vmatpush1.msra.mxu0 0.0
        %419 = vmatprep.subr.mxu0 0.0
        %420 = vmatpush1.msra.mxu0 0.0
        %421 = vmatprep.subr.mxu0 0.0
        %422 = vmatpush1.msra.mxu0 0.0
        %423 = vmatprep.subr.mxu0 0.0
        %424 = vmatpush1.msra.mxu0 0.0
        %425 = vmatprep.mubr.f32.mxu0 0.0
        %426 = vmatmul.mubr.f32.gmra.mrb[0].mxu0 %v359
        %v427 = vpop.f32.mrb[0].mxu0
        %v428 = vadd.f32 0.0, %v427
        %v429 = vpop.f32.mrb[0].mxu0
        %430 = vdwg.mxu0
        %v431 = vld [vmem:[%s3] sm:$0xff]
        %v432 = vmul.f32 %v428, %v431
        %v433 = vld [vmem:[%s4] sm:$0xff]
        %v434 = vadd.f32 %v432, %v433
        %v435 = vmax.f32 %v434, 0.0
        %v436 = vld [vmem:[%s5] sm:$0xff]
        %v437 = vld [vmem:[%s5 + $0x8] sm:$0xff]
        %v438 = vld [vmem:[%s5 + $0x10] sm:$0xff]
        %v439 = vld [vmem:[%s5 + $0x18] sm:$0xff]
        %v440 = vld [vmem:[%s5 + $0x20] sm:$0xff]
        %v441 = vld [vmem:[%s5 + $0x28] sm:$0xff]
        %v442 = vld [vmem:[%s5 + $0x30] sm:$0xff]
        %v443 = vld [vmem:[%s5 + $0x38] sm:$0xff]
        %v444 = vld [vmem:[%s5 + $0x40] sm:$0xff]
        %v445 = vld [vmem:[%s5 + $0x48] sm:$0xff]
        %v446 = vld [vmem:[%s5 + $0x50] sm:$0xff]
        %v447 = vld [vmem:[%s5 + $0x58] sm:$0xff]
        %v448 = vld [vmem:[%s5 + $0x60] sm:$0x3]
        %v449 = vld [vmem:[%s5 + $0x68] sm:$0x3]
        %vm450 = vcmask 408576
        %v452 = vsel %vm450, %v435, 0
        %vm454 = vcmask 1041408
        %v456 = vsel %vm454, %v448, 0
        %v459 = vsel %vm454, %v449, 0
        %461 = vmatprep.subr.mxu0 %v437
        %462 = vmatpush1.msra.mxu0 %v436
        %463 = vmatprep.subr.mxu0 %v439
        %464 = vmatpush1.msra.mxu0 %v438
        %465 = vmatprep.subr.mxu0 %v441
        %466 = vmatpush1.msra.mxu0 %v440
        %467 = vmatprep.subr.mxu0 %v443
        %468 = vmatpush1.msra.mxu0 %v442
        %469 = vmatprep.subr.mxu0 %v445
        %470 = vmatpush1.msra.mxu0 %v444
        %471 = vmatprep.subr.mxu0 %v447
        %472 = vmatpush1.msra.mxu0 %v446
        %473 = vmatprep.subr.mxu0 %v459
        %474 = vmatpush1.msra.mxu0 %v456
        %475 = vmatprep.subr.mxu0 0.0
        %476 = vmatpush1.msra.mxu0 0.0
        %477 = vmatprep.subr.mxu0 0.0
        %478 = vmatpush1.msra.mxu0 0.0
        %479 = vmatprep.subr.mxu0 0.0
        %480 = vmatpush1.msra.mxu0 0.0
        %481 = vmatprep.subr.mxu0 0.0
        %482 = vmatpush1.msra.mxu0 0.0
        %483 = vmatprep.subr.mxu0 0.0
        %484 = vmatpush1.msra.mxu0 0.0
        %485 = vmatprep.subr.mxu0 0.0
        %486 = vmatpush1.msra.mxu0 0.0
        %487 = vmatprep.subr.mxu0 0.0
        %488 = vmatpush1.msra.mxu0 0.0
        %489 = vmatprep.subr.mxu0 0.0
        %490 = vmatpush1.msra.mxu0 0.0
        %491 = vmatprep.subr.mxu0 0.0
        %492 = vmatpush1.msra.mxu0 0.0
        %493 = vmatprep.subr.mxu0 0.0
        %494 = vmatpush1.msra.mxu0 0.0
        %495 = vmatprep.subr.mxu0 0.0
        %496 = vmatpush1.msra.mxu0 0.0
        %497 = vmatprep.subr.mxu0 0.0
        %498 = vmatpush1.msra.mxu0 0.0
        %499 = vmatprep.subr.mxu0 0.0
        %500 = vmatpush1.msra.mxu0 0.0
        %501 = vmatprep.subr.mxu0 0.0
        %502 = vmatpush1.msra.mxu0 0.0
        %503 = vmatprep.subr.mxu0 0.0
        %504 = vmatpush1.msra.mxu0 0.0
        %505 = vmatprep.subr.mxu0 0.0
        %506 = vmatpush1.msra.mxu0 0.0
        %507 = vmatprep.subr.mxu0 0.0
        %508 = vmatpush1.msra.mxu0 0.0
        %509 = vmatprep.subr.mxu0 0.0
        %510 = vmatpush1.msra.mxu0 0.0
        %511 = vmatprep.subr.mxu0 0.0
        %512 = vmatpush1.msra.mxu0 0.0
        %513 = vmatprep.subr.mxu0 0.0
        %514 = vmatpush1.msra.mxu0 0.0
        %515 = vmatprep.subr.mxu0 0.0
        %516 = vmatpush1.msra.mxu0 0.0
        %517 = vmatprep.subr.mxu0 0.0
        %518 = vmatpush1.msra.mxu0 0.0
        %519 = vmatprep.subr.mxu0 0.0
        %520 = vmatpush1.msra.mxu0 0.0
        %521 = vmatprep.subr.mxu0 0.0
        %522 = vmatpush1.msra.mxu0 0.0
        %523 = vmatprep.subr.mxu0 0.0
        %524 = vmatpush1.msra.mxu0 0.0
        %525 = vmatprep.mubr.f32.mxu0 0.0
        %526 = vmatmul.mubr.f32.gmra.mrb[0].mxu0 %v452
        %v527 = vpop.f32.mrb[0].mxu0
        %v528 = vadd.f32 0.0, %v527
        %v529 = vpop.f32.mrb[0].mxu0
        %v530 = vadd.f32 0.0, %v529
        %531 = vdwg.mxu0
        %532 = vst [vmem:[%s244 + $0x10] sm:$0xff] %v528
        %533 = vst [vmem:[%s244 + $0x18] sm:$0xff] %v530
        %s534 = sand.u32 %s159, 1
        %s535 = scalar_lea.sflag [#allocation3], %s534
        %s536 = sand.u32 %s159, 1
        %s537 = smul.addr %s536, 32
        %s538 = scalar_lea.vmem [#allocation2], %s537
        // Predicated region
        $region45: #{tpu_custom_call.1} parent=43 // pred_check
          %p539 = pneg %p169
        $region46: #{tpu_custom_call.1} parent=43 // pred_check_branch
          %541 = sbr.rel (%p539) target = $region48
        $region47: #{tpu_custom_call.1} parent=43 // pred_region
          %s543 = ssub.s32 512, 512
          %544 = vsyncadd %s535, %s543
          %s545 = smul.addr %s20, 4
          %s546 = smul.addr %s545, 128
          %s547 = scalar_lea.hbm %s6, %s546
          %s548 = sshll.u32 %s538, 4
          %s549 = int_to_ptr.vmem [resolvable:$true] %s548
          %554 = dma.vmem_to_hbm [thread:$0]  %s549, 512, %s547, %s535, 256, 256, 16
        $region48: #{tpu_custom_call.1} parent=43 // pred_fallthru
          _
      $region44: #{tpu_custom_call.1} parent=5 // pred_fallthru
        _
      %p555 = scmp.le.s32.totalorder 2, %s15
      // Predicated region
      $region49: #{tpu_custom_call.1} parent=5 // pred_check
        %p556 = pneg %p555
      $region50: #{tpu_custom_call.1} parent=5 // pred_check_branch
        %558 = sbr.rel (%p556) target = $region52
      $region51: #{tpu_custom_call.1} parent=5 // pred_region
        %s559 = ssub.s32 %s15, 2
        // Predicated region
        $region53: #{tpu_custom_call.1} parent=51 // pred_check
          %p560 = pneg %p175
        $region54: #{tpu_custom_call.1} parent=51 // pred_check_branch
          %562 = sbr.rel (%p560) target = $region56
        $region55: #{tpu_custom_call.1} parent=51 // pred_region
          %s563 = sand.u32 %s160, 1
          %s564 = scalar_lea.sflag [#allocation3], %s563
          %s565 = sand.u32 %s160, 1
          %s566 = smul.addr %s565, 32
          %s567 = scalar_lea.vmem [#allocation2], %s566
          %568 = dma.done %s564, 512
        $region56: #{tpu_custom_call.1} parent=51 // pred_fallthru
          _
      $region52: #{tpu_custom_call.1} parent=5 // pred_fallthru
        _
    $region6: #{tpu_custom_call.1} parent=1 // loop_footer
      %s19 = sadd.s32 1, %s15
    $region7: #{tpu_custom_call.1} parent=1 // loop_footer_branch
      %14 = sbr.rel target = $region3
    $region8: #{tpu_custom_call.1} parent=1 // loop_exit
      _
    %569 = vsyncpa [#allocation3], 1
    %s570 = scalar_lea.sflag [#allocation3], 1
    %571 = vsyncpa %s570, 1

</llo_original>
